<compile_context>
chip_gen: v6e
topology: v6e:2x2x1
jax: 0.10.0
libtpu: 0.0.40
codegen_flags: <defaults>
</compile_context>

<pallas_src>
import functools
import math

import jax
import jax.numpy as jnp
from jax.experimental import pallas as pl
from jax.experimental.pallas import tpu as pltpu


# ----------------------------------------------------------------------------
# Packed-parameter layout: one (rows, nhid) slab, every matrix 8-row aligned.
# ----------------------------------------------------------------------------
def _round8(n):
    return ((n + 7) // 8) * 8


def _param_layout(num_features, nhid, num_classes):
    assert num_classes <= nhid and (nhid // 2) <= nhid
    off = {}
    cur = 0
    for name, rows in (("c1w", num_features), ("c2w", nhid), ("c3w", nhid),
                       ("l1w", 2 * nhid), ("l2w", nhid), ("l3w", nhid // 2)):
        off[name] = cur
        cur += _round8(rows)          # keep every matrix slice 8-sublane aligned
    off["vec"] = cur                  # 9 single-row vectors (biases + pool weights)
    cur += 9
    return off, cur


def pack_params(params, num_features, nhid, num_classes):
    """Pack all 17 tiny parameter tensors into one (rows, nhid) f32 slab."""
    off, rows = _param_layout(num_features, nhid, num_classes)
    slab = jnp.zeros((rows, nhid), jnp.float32)

    def put(s, r0, arr):
        r, c = arr.shape
        return s.at[r0:r0 + r, 0:c].set(arr.astype(jnp.float32))

    slab = put(slab, off["c1w"], params["conv1_w"])
    slab = put(slab, off["c2w"], params["conv2_w"])
    slab = put(slab, off["c3w"], params["conv3_w"])
    slab = put(slab, off["l1w"], params["lin1_w"])
    slab = put(slab, off["l2w"], params["lin2_w"])
    slab = put(slab, off["l3w"], params["lin3_w"])
    vec = off["vec"]
    for i, name in enumerate(("conv1_b", "conv2_b", "conv3_b",
                              "pool1_p", "pool2_p", "pool3_p",
                              "lin1_b", "lin2_b", "lin3_b")):
        slab = put(slab, vec + i, params[name])
    return slab


# ----------------------------------------------------------------------------
# Fused Pallas kernel: the entire Net.forward for one graph (one grid step).
# ----------------------------------------------------------------------------
def _fused_net_kernel(x_ref, a_ref, p_ref, o_ref, *,
                      off, ks, num_features, nhid, num_classes, mxu_bf16):
    f32 = jnp.float32
    NEG = f32(-1e30)
    N = a_ref.shape[0]
    nh2 = nhid // 2
    vec = off["vec"]

    def mm(a, b):
        if mxu_bf16:   # bf16 operands, f32 accumulation (lever once shapes grow)
            a = a.astype(jnp.bfloat16)
            b = b.astype(jnp.bfloat16)
        return jnp.dot(a, b, preferred_element_type=f32)

    x = x_ref[...]                    # (N, F0) node features
    a = a_ref[...]                    # (N, N) raw 0/1 adjacency (no self loops)

    idx_i = jax.lax.broadcasted_iota(jnp.int32, (N, N), 0)   # sublane index
    idx_j = jax.lax.broadcasted_iota(jnp.int32, (N, N), 1)   # lane index
    offdiag = idx_i != idx_j
    eye = (idx_i == idx_j).astype(f32)

    valid_col = jnp.ones((N, 1), f32)     # surviving-node mask, sublane layout
    valid_row = jnp.ones((1, N), f32)     # same mask, lane layout
    ro_max = jnp.zeros((1, nhid), f32)    # sum over layers of global-max-pool
    ro_mean = jnp.zeros((1, nhid), f32)   # sum over layers of global-mean-pool

    layer_slices = (
        (off["c1w"], num_features, vec + 0, vec + 3),
        (off["c2w"], nhid,         vec + 1, vec + 4),
        (off["c3w"], nhid,         vec + 2, vec + 5),
    )

    for (w_off, w_rows, b_row, p_row), k in zip(layer_slices, ks):  # unrolled
        w = p_ref[w_off:w_off + w_rows, :]          # (F_in, nhid)
        b = p_ref[b_row:b_row + 1, :]               # (1, nhid)
        p = p_ref[p_row:p_row + 1, :]               # (1, nhid) pooling weight

        # ---- GCNConv + relu: relu(D^-1/2 (A+I) D^-1/2 @ X @ W + b) ----------
        a_hat = a + eye
        dinv_c = jax.lax.rsqrt(jnp.sum(a_hat, axis=1, keepdims=True))   # (N,1)
        dinv_r = jax.lax.rsqrt(jnp.sum(a_hat, axis=0, keepdims=True))   # (1,N)
        a_norm = a_hat * dinv_c * dinv_r
        if x.shape[1] < w.shape[1]:   # F_in < F_out: (A @ X) @ W is cheaper
            h = mm(mm(a_norm, x), w) + b
        else:                         # otherwise A @ (X @ W)
            h = mm(a_norm, mm(x, w)) + b
        h = jnp.maximum(h, 0.0)

        # ---- TopKPooling: score = (h . p)/||p||, keep top-k, gate by tanh ---
        pinv = jax.lax.rsqrt(jnp.sum(p * p))                    # EUP
        sc = jnp.sum(h * p, axis=1, keepdims=True) * pinv       # (N,1) scores
        msc = jnp.where(valid_col > 0.5, sc, NEG)               # dropped never win
        # (1,N) orientation derived EXACTLY from msc (bit-identical copy).
        msr = jnp.sum(msc * eye, axis=0, keepdims=True)         # (1,N)
        # "i beats j": strictly higher score, ties -> lower index; no diagonal.
        i_beats_j = offdiag & ((msc > msr) | ((msc == msr) & (idx_i < idx_j)))
        j_beats_i = offdiag & ((msr > msc) | ((msr == msc) & (idx_j < idx_i)))
        rank_col = jnp.sum(j_beats_i.astype(f32), axis=1, keepdims=True)  # (N,1)
        rank_row = jnp.sum(i_beats_j.astype(f32), axis=0, keepdims=True)  # (1,N)
        keep_col = jnp.where(rank_col < k, 1.0, 0.0) * valid_col
        keep_row = jnp.where(rank_row < k, 1.0, 0.0) * valid_row

        x = h * jnp.tanh(sc) * keep_col        # gate kept nodes, zero the rest
        a = a * keep_col * keep_row            # filter_adj: edges among kept nodes
        valid_col, valid_row = keep_col, keep_row

        # ---- readout [gmp | gap] over the k kept nodes; accumulate x1+x2+x3 -
        ro_max = ro_max + jnp.max(jnp.where(keep_col > 0.5, x, NEG),
                                  axis=0, keepdims=True)
        ro_mean = ro_mean + jnp.sum(x, axis=0, keepdims=True) * (1.0 / k)

    # ---- MLP head (dropout is identity in eval mode) ------------------------
    # lin1 consumes [gmp | gap]: split its weight rows instead of concatenating.
    l1 = off["l1w"]
    h1 = jnp.maximum(mm(ro_max, p_ref[l1:l1 + nhid, :])
                     + mm(ro_mean, p_ref[l1 + nhid:l1 + 2 * nhid, :])
                     + p_ref[vec + 6:vec + 7, :], 0.0)
    l2 = off["l2w"]
    h2 = jnp.maximum(mm(h1, p_ref[l2:l2 + nhid, 0:nh2])
                     + p_ref[vec + 7:vec + 8, 0:nh2], 0.0)
    l3 = off["l3w"]
    z = mm(h2, p_ref[l3:l3 + nh2, 0:num_classes]) \
        + p_ref[vec + 8:vec + 9, 0:num_classes]
    z = z - jnp.max(z, axis=-1, keepdims=True)
    o_ref[...] = z - jnp.log(jnp.sum(jnp.exp(z), axis=-1, keepdims=True))


# ----------------------------------------------------------------------------
# Wrapper: batched pallas_call with a "parallel" grid axis over graphs.
# ----------------------------------------------------------------------------
def net_forward(xb, adjb, param_slab, *, num_features, nhid, num_classes,
                pooling_ratio=0.5, mxu_bf16=False):
    B, N, F0 = xb.shape
    assert F0 == num_features and adjb.shape == (B, N, N)
    off, rows = _param_layout(num_features, nhid, num_classes)
    assert param_slab.shape == (rows, nhid)

    # Static per-layer keep counts: k = ceil(ratio * current_n).
    ks, cur = [], N
    for _ in range(3):
        cur = int(math.ceil(pooling_ratio * cur))
        ks.append(cur)

    kernel = functools.partial(
        _fused_net_kernel, off=off, ks=tuple(ks), num_features=num_features,
        nhid=nhid, num_classes=num_classes, mxu_bf16=mxu_bf16)

    out = pl.pallas_call(
        kernel,
        grid=(B,),
        in_specs=[
            pl.BlockSpec((None, N, F0), lambda b: (b, 0, 0)),   # per-graph x
            pl.BlockSpec((None, N, N), lambda b: (b, 0, 0)),    # per-graph adj
            pl.BlockSpec((rows, nhid), lambda b: (0, 0)),       # params: resident
        ],
        out_specs=pl.BlockSpec((None, 1, num_classes), lambda b: (b, 0, 0)),
        out_shape=jax.ShapeDtypeStruct((B, 1, num_classes), jnp.float32),
        compiler_params=pltpu.CompilerParams(
            dimension_semantics=("parallel",)),   # shards graphs over v7x's 2 TCs
    )(xb, adjb, param_slab)
    return out.reshape(B, num_classes)


# ----------------------------------------------------------------------------
# Pure-JAX reference (gather-based, matches the PyTorch module) for validation.
# ----------------------------------------------------------------------------
def net_forward_reference(x, a_raw, params, pooling_ratio=0.5):
    def gcn_norm(a):
        m = a.shape[0]
        a_hat = a + jnp.eye(m, dtype=a.dtype)
        dinv = jax.lax.rsqrt(jnp.sum(a_hat, axis=1))
        return a_hat * dinv[:, None] * dinv[None, :]

    readouts = []
    for layer in (1, 2, 3):
        a_norm = gcn_norm(a_raw)
        x = jnp.maximum(
            a_norm @ (x @ params[f"conv{layer}_w"]) + params[f"conv{layer}_b"], 0.0)
        p = params[f"pool{layer}_p"]                        # (1, nhid)
        s = jnp.tanh(jnp.sum(x * p, axis=1) / jnp.sqrt(jnp.sum(p * p)))
        k = int(math.ceil(pooling_ratio * x.shape[0]))
        top_vals, perm = jax.lax.top_k(s, k)
        x = x[perm] * top_vals[:, None]
        a_raw = a_raw[perm][:, perm]
        readouts.append(jnp.concatenate(
            [jnp.max(x, axis=0, keepdims=True), jnp.mean(x, axis=0, keepdims=True)],
            axis=1))

    h = readouts[0] + readouts[1] + readouts[2]
    h = jnp.maximum(h @ params["lin1_w"] + params["lin1_b"], 0.0)
    h = jnp.maximum(h @ params["lin2_w"] + params["lin2_b"], 0.0)
    z = h @ params["lin3_w"] + params["lin3_b"]
    return jax.nn.log_softmax(z, axis=-1)


# ----------------------------------------------------------------------------
# Deterministic parameters / inputs.
# ----------------------------------------------------------------------------
def init_params(key, num_features=8, nhid=32, num_classes=2):
    keys = jax.random.split(key, 15)
    it = iter(range(15))

    def w(k, shape, scale=0.1):
        return (scale * jax.random.normal(k, shape)).astype(jnp.float32)

    p = {}
    p["conv1_w"] = w(keys[next(it)], (num_features, nhid))
    p["conv1_b"] = w(keys[next(it)], (1, nhid))
    p["conv2_w"] = w(keys[next(it)], (nhid, nhid))
    p["conv2_b"] = w(keys[next(it)], (1, nhid))
    p["conv3_w"] = w(keys[next(it)], (nhid, nhid))
    p["conv3_b"] = w(keys[next(it)], (1, nhid))
    p["pool1_p"] = w(keys[next(it)], (1, nhid))   # TopKPooling weight, lane layout
    p["pool2_p"] = w(keys[next(it)], (1, nhid))
    p["pool3_p"] = w(keys[next(it)], (1, nhid))
    p["lin1_w"] = w(keys[next(it)], (2 * nhid, nhid))
    p["lin1_b"] = w(keys[next(it)], (1, nhid))
    p["lin2_w"] = w(keys[next(it)], (nhid, nhid // 2))
    p["lin2_b"] = w(keys[next(it)], (1, nhid // 2))
    p["lin3_w"] = w(keys[next(it)], (nhid // 2, num_classes))
    p["lin3_b"] = w(keys[next(it)], (1, num_classes))
    return p


def make_graph(key, g, n_nodes=16, num_features=8):
    x = jax.random.normal(key, (n_nodes, num_features)).astype(jnp.float32)
    # undirected ring + two per-graph chords (both directions, no self loops)
    src, dst = [], []
    for u in range(n_nodes):
        v = (u + 1) % n_nodes
        src += [u, v]
        dst += [v, u]
    for (u, v) in [(g % n_nodes, (g + 8) % n_nodes),
                   ((g + 3) % n_nodes, (g + 11) % n_nodes)]:
        src += [u, v]
        dst += [v, u]
    edge_index = jnp.array([src, dst], dtype=jnp.int32)
    return x, edge_index


if __name__ == "__main__":
    NUM_FEATURES, NHID, NUM_CLASSES = 8, 32, 2
    N_NODES, BATCH, RATIO = 16, 4, 0.5

    key = jax.random.PRNGKey(0)
    k_param, k_feat = jax.random.split(key)

    params = init_params(k_param, NUM_FEATURES, NHID, NUM_CLASSES)
    slab = pack_params(params, NUM_FEATURES, NHID, NUM_CLASSES)  # packed once

    xs, adjs = [], []
    feat_keys = jax.random.split(k_feat, BATCH)
    for g in range(BATCH):
        x, edge_index = make_graph(feat_keys[g], g, N_NODES, NUM_FEATURES)
        adj = jnp.zeros((N_NODES, N_NODES), jnp.float32).at[
            edge_index[1], edge_index[0]].set(1.0)
        xs.append(x)
        adjs.append(adj)
    xb = jnp.stack(xs)      # (B, N, F0)
    adjb = jnp.stack(adjs)  # (B, N, N)

    fwd = jax.jit(functools.partial(
        net_forward, num_features=NUM_FEATURES, nhid=NHID,
        num_classes=NUM_CLASSES, pooling_ratio=RATIO, mxu_bf16=False))
    out = jax.block_until_ready(fwd(xb, adjb, slab))

    assert out.shape == (BATCH, NUM_CLASSES)
    # log-softmax rows should exponentiate-sum to ~1
    assert float(jnp.max(jnp.abs(jnp.sum(jnp.exp(out), axis=-1) - 1.0))) < 1e-4

    # Cross-check the fused masked kernel against the gather-based reference.
    with jax.default_matmul_precision("highest"):
        refs = jnp.stack([
            net_forward_reference(xb[g], adjb[g], params, RATIO)[0]
            for g in range(BATCH)])
    refs = jax.block_until_ready(refs)
    assert float(jnp.max(jnp.abs(out - refs))) < 2e-3, (out, refs)

    print("KERNEL_OK")
</pallas_src>

<mosaic_0001>
module attributes {stable_mosaic.version = 11 : i64} {
  func.func @_fused_net_kernel(%arg0: i32, %arg1: memref<1x16x8xf32, #tpu.memory_space<vmem>>, %arg2: memref<1x16x16xf32, #tpu.memory_space<vmem>>, %arg3: memref<193x32xf32, #tpu.memory_space<vmem>>, %arg4: memref<1x1x2xf32, #tpu.memory_space<vmem>>) attributes {dimension_semantics = [#tpu.dimension_semantics<parallel>], iteration_bounds = array<i64: 4>, scalar_prefetch = 0 : i64, scratch_operands = 0 : i64, tpu.core_type = #tpu.core_type<tc>, window_params = [{transform_indices = @transform_0, window_bounds = array<i64: 1, 16, 8>}, {transform_indices = @transform_1, window_bounds = array<i64: 1, 16, 16>}, {pipeline_mode = #tpu.pipeline_mode<synchronous>, transform_indices = @transform_2, window_bounds = array<i64: 193, 32>}, {transform_indices = @transform_3, window_bounds = array<i64: 1, 1, 2>}]} {
    %c0 = arith.constant 0 : index
    %c0_0 = arith.constant 0 : index
    %c0_1 = arith.constant 0 : index
    %0 = vector.load %arg1[%c0, %c0_0, %c0_1] : memref<1x16x8xf32, #tpu.memory_space<vmem>>, vector<1x16x8xf32>
    %1 = vector.shape_cast %0 : vector<1x16x8xf32> to vector<16x8xf32>
    %c0_2 = arith.constant 0 : index
    %c0_3 = arith.constant 0 : index
    %c0_4 = arith.constant 0 : index
    %2 = vector.load %arg2[%c0_2, %c0_3, %c0_4] : memref<1x16x16xf32, #tpu.memory_space<vmem>>, vector<1x16x16xf32>
    %3 = vector.shape_cast %2 : vector<1x16x16xf32> to vector<16x16xf32>
    %4 = tpu.iota {dimensions = array<i32: 0>} : vector<16x16xi32>
    %5 = tpu.iota {dimensions = array<i32: 1>} : vector<16x16xi32>
    %6 = arith.cmpi ne, %4, %5 : vector<16x16xi32>
    %7 = arith.cmpi eq, %4, %5 : vector<16x16xi32>
    %8 = arith.extui %7 : vector<16x16xi1> to vector<16x16xi32>
    %9 = arith.sitofp %8 : vector<16x16xi32> to vector<16x16xf32>
    %cst = arith.constant 1.000000e+00 : f32
    %10 = vector.broadcast %cst : f32 to vector<16x1xf32>
    %cst_5 = arith.constant 1.000000e+00 : f32
    %11 = vector.broadcast %cst_5 : f32 to vector<1x16xf32>
    %cst_6 = arith.constant 0.000000e+00 : f32
    %12 = vector.broadcast %cst_6 : f32 to vector<1x32xf32>
    %cst_7 = arith.constant 0.000000e+00 : f32
    %13 = vector.broadcast %cst_7 : f32 to vector<1x32xf32>
    %c0_8 = arith.constant 0 : index
    %c0_9 = arith.constant 0 : index
    %14 = vector.load %arg3[%c0_8, %c0_9] : memref<193x32xf32, #tpu.memory_space<vmem>>, vector<8x32xf32>
    %c184 = arith.constant 184 : index
    %c0_10 = arith.constant 0 : index
    %15 = vector.load %arg3[%c184, %c0_10] : memref<193x32xf32, #tpu.memory_space<vmem>>, vector<1x32xf32>
    %c187 = arith.constant 187 : index
    %c0_11 = arith.constant 0 : index
    %16 = vector.load %arg3[%c187, %c0_11] : memref<193x32xf32, #tpu.memory_space<vmem>>, vector<1x32xf32>
    %17 = arith.addf %3, %9 : vector<16x16xf32>
    %cst_12 = arith.constant dense<0.000000e+00> : vector<16xf32>
    %18 = vector.multi_reduction <add>, %17, %cst_12 [1] : vector<16x16xf32> to vector<16xf32>
    %19 = vector.shape_cast %18 : vector<16xf32> to vector<16x1xf32>
    %20 = math.rsqrt %19 : vector<16x1xf32>
    %cst_13 = arith.constant dense<0.000000e+00> : vector<16xf32>
    %21 = vector.multi_reduction <add>, %17, %cst_13 [0] : vector<16x16xf32> to vector<16xf32>
    %22 = vector.shape_cast %21 : vector<16xf32> to vector<1x16xf32>
    %23 = math.rsqrt %22 : vector<1x16xf32>
    %24 = vector.broadcast %20 : vector<16x1xf32> to vector<16x16xf32>
    %25 = arith.mulf %17, %24 : vector<16x16xf32>
    %26 = vector.broadcast %23 : vector<1x16xf32> to vector<16x16xf32>
    %27 = arith.mulf %25, %26 : vector<16x16xf32>
    %cst_14 = arith.constant dense<0.000000e+00> : vector<16x8xf32>
    %28 = tpu.matmul %27, %1, %cst_14 {dimension_numbers = #tpu.dot_dimension_numbers<[1], [0], [0], [1], [0, 0, 1, 1], [], []>} : vector<16x16xf32>, vector<16x8xf32>, vector<16x8xf32> -> vector<16x8xf32>
    %cst_15 = arith.constant dense<0.000000e+00> : vector<16x32xf32>
    %29 = tpu.matmul %28, %14, %cst_15 {dimension_numbers = #tpu.dot_dimension_numbers<[1], [0], [0], [1], [0, 0, 1, 1], [], []>} : vector<16x8xf32>, vector<8x32xf32>, vector<16x32xf32> -> vector<16x32xf32>
    %30 = vector.broadcast %15 : vector<1x32xf32> to vector<16x32xf32>
    %31 = arith.addf %29, %30 : vector<16x32xf32>
    %cst_16 = arith.constant 0.000000e+00 : f32
    %32 = vector.broadcast %cst_16 : f32 to vector<16x32xf32>
    %33 = arith.maximumf %31, %32 : vector<16x32xf32>
    %34 = arith.mulf %16, %16 : vector<1x32xf32>
    %35 = vector.shape_cast %34 : vector<1x32xf32> to vector<1x1x32xf32>
    %cst_17 = arith.constant dense<0.000000e+00> : vector<1xf32>
    %36 = vector.multi_reduction <add>, %35, %cst_17 [1, 2] : vector<1x1x32xf32> to vector<1xf32>
    %37 = vector.shape_cast %36 : vector<1xf32> to vector<1x1x1xf32>
    %38 = vector.extract %37[0, 0, 0] : f32 from vector<1x1x1xf32>
    %39 = math.rsqrt %38 : f32
    %40 = vector.broadcast %16 : vector<1x32xf32> to vector<16x32xf32>
    %41 = arith.mulf %33, %40 : vector<16x32xf32>
    %cst_18 = arith.constant dense<0.000000e+00> : vector<16xf32>
    %42 = vector.multi_reduction <add>, %41, %cst_18 [1] : vector<16x32xf32> to vector<16xf32>
    %43 = vector.shape_cast %42 : vector<16xf32> to vector<16x1xf32>
    %44 = vector.broadcast %39 : f32 to vector<16x1xf32>
    %45 = arith.mulf %43, %44 : vector<16x1xf32>
    %cst_19 = arith.constant 5.000000e-01 : f32
    %46 = vector.broadcast %cst_19 : f32 to vector<16x1xf32>
    %47 = arith.cmpf ogt, %10, %46 : vector<16x1xf32>
    %cst_20 = arith.constant -1.000000e+30 : f32
    %48 = vector.broadcast %cst_20 : f32 to vector<16x1xf32>
    %49 = arith.select %47, %45, %48 : vector<16x1xi1>, vector<16x1xf32>
    %50 = vector.broadcast %49 : vector<16x1xf32> to vector<16x16xf32>
    %51 = arith.mulf %50, %9 : vector<16x16xf32>
    %cst_21 = arith.constant dense<0.000000e+00> : vector<16xf32>
    %52 = vector.multi_reduction <add>, %51, %cst_21 [0] : vector<16x16xf32> to vector<16xf32>
    %53 = vector.shape_cast %52 : vector<16xf32> to vector<1x16xf32>
    %54 = vector.broadcast %49 : vector<16x1xf32> to vector<16x16xf32>
    %55 = vector.broadcast %53 : vector<1x16xf32> to vector<16x16xf32>
    %56 = arith.cmpf ogt, %54, %55 : vector<16x16xf32>
    %57 = vector.broadcast %49 : vector<16x1xf32> to vector<16x16xf32>
    %58 = vector.broadcast %53 : vector<1x16xf32> to vector<16x16xf32>
    %59 = arith.cmpf oeq, %57, %58 : vector<16x16xf32>
    %60 = arith.cmpi slt, %4, %5 : vector<16x16xi32>
    %61 = arith.andi %59, %60 : vector<16x16xi1>
    %62 = arith.ori %56, %61 : vector<16x16xi1>
    %63 = arith.andi %6, %62 : vector<16x16xi1>
    %64 = vector.broadcast %53 : vector<1x16xf32> to vector<16x16xf32>
    %65 = vector.broadcast %49 : vector<16x1xf32> to vector<16x16xf32>
    %66 = arith.cmpf ogt, %64, %65 : vector<16x16xf32>
    %67 = vector.broadcast %53 : vector<1x16xf32> to vector<16x16xf32>
    %68 = vector.broadcast %49 : vector<16x1xf32> to vector<16x16xf32>
    %69 = arith.cmpf oeq, %67, %68 : vector<16x16xf32>
    %70 = arith.cmpi slt, %5, %4 : vector<16x16xi32>
    %71 = arith.andi %69, %70 : vector<16x16xi1>
    %72 = arith.ori %66, %71 : vector<16x16xi1>
    %73 = arith.andi %6, %72 : vector<16x16xi1>
    %74 = arith.extui %73 : vector<16x16xi1> to vector<16x16xi32>
    %75 = arith.sitofp %74 : vector<16x16xi32> to vector<16x16xf32>
    %cst_22 = arith.constant dense<0.000000e+00> : vector<16xf32>
    %76 = vector.multi_reduction <add>, %75, %cst_22 [1] : vector<16x16xf32> to vector<16xf32>
    %77 = vector.shape_cast %76 : vector<16xf32> to vector<16x1xf32>
    %78 = arith.extui %63 : vector<16x16xi1> to vector<16x16xi32>
    %79 = arith.sitofp %78 : vector<16x16xi32> to vector<16x16xf32>
    %cst_23 = arith.constant dense<0.000000e+00> : vector<16xf32>
    %80 = vector.multi_reduction <add>, %79, %cst_23 [0] : vector<16x16xf32> to vector<16xf32>
    %81 = vector.shape_cast %80 : vector<16xf32> to vector<1x16xf32>
    %cst_24 = arith.constant 8.000000e+00 : f32
    %82 = vector.broadcast %cst_24 : f32 to vector<16x1xf32>
    %83 = arith.cmpf olt, %77, %82 : vector<16x1xf32>
    %cst_25 = arith.constant 1.000000e+00 : f32
    %cst_26 = arith.constant 0.000000e+00 : f32
    %84 = vector.broadcast %cst_25 : f32 to vector<16x1xf32>
    %85 = vector.broadcast %cst_26 : f32 to vector<16x1xf32>
    %86 = arith.select %83, %84, %85 : vector<16x1xi1>, vector<16x1xf32>
    %87 = arith.mulf %86, %10 : vector<16x1xf32>
    %cst_27 = arith.constant 8.000000e+00 : f32
    %88 = vector.broadcast %cst_27 : f32 to vector<1x16xf32>
    %89 = arith.cmpf olt, %81, %88 : vector<1x16xf32>
    %cst_28 = arith.constant 1.000000e+00 : f32
    %cst_29 = arith.constant 0.000000e+00 : f32
    %90 = vector.broadcast %cst_28 : f32 to vector<1x16xf32>
    %91 = vector.broadcast %cst_29 : f32 to vector<1x16xf32>
    %92 = arith.select %89, %90, %91 : vector<1x16xi1>, vector<1x16xf32>
    %93 = arith.mulf %92, %11 : vector<1x16xf32>
    %94 = math.tanh %45 : vector<16x1xf32>
    %95 = vector.broadcast %94 : vector<16x1xf32> to vector<16x32xf32>
    %96 = arith.mulf %33, %95 : vector<16x32xf32>
    %97 = vector.broadcast %87 : vector<16x1xf32> to vector<16x32xf32>
    %98 = arith.mulf %96, %97 : vector<16x32xf32>
    %99 = vector.broadcast %87 : vector<16x1xf32> to vector<16x16xf32>
    %100 = arith.mulf %3, %99 : vector<16x16xf32>
    %101 = vector.broadcast %93 : vector<1x16xf32> to vector<16x16xf32>
    %102 = arith.mulf %100, %101 : vector<16x16xf32>
    %cst_30 = arith.constant 5.000000e-01 : f32
    %103 = vector.broadcast %cst_30 : f32 to vector<16x1xf32>
    %104 = arith.cmpf ogt, %87, %103 : vector<16x1xf32>
    %cst_31 = arith.constant -1.000000e+30 : f32
    %105 = vector.shape_cast %104 : vector<16x1xi1> to vector<16x1xi1>
    %106 = vector.broadcast %105 : vector<16x1xi1> to vector<16x32xi1>
    %107 = vector.broadcast %cst_31 : f32 to vector<16x32xf32>
    %108 = arith.select %106, %98, %107 : vector<16x32xi1>, vector<16x32xf32>
    %cst_32 = arith.constant dense<0xFF800000> : vector<32xf32>
    %109 = vector.multi_reduction <maximumf>, %108, %cst_32 [0] : vector<16x32xf32> to vector<32xf32>
    %110 = vector.shape_cast %109 : vector<32xf32> to vector<1x32xf32>
    %111 = arith.addf %12, %110 : vector<1x32xf32>
    %cst_33 = arith.constant dense<0.000000e+00> : vector<32xf32>
    %112 = vector.multi_reduction <add>, %98, %cst_33 [0] : vector<16x32xf32> to vector<32xf32>
    %113 = vector.shape_cast %112 : vector<32xf32> to vector<1x32xf32>
    %cst_34 = arith.constant 1.250000e-01 : f32
    %114 = vector.broadcast %cst_34 : f32 to vector<1x32xf32>
    %115 = arith.mulf %113, %114 : vector<1x32xf32>
    %116 = arith.addf %13, %115 : vector<1x32xf32>
    %c8 = arith.constant 8 : index
    %c0_35 = arith.constant 0 : index
    %117 = vector.load %arg3[%c8, %c0_35] : memref<193x32xf32, #tpu.memory_space<vmem>>, vector<32x32xf32>
    %c185 = arith.constant 185 : index
    %c0_36 = arith.constant 0 : index
    %118 = vector.load %arg3[%c185, %c0_36] : memref<193x32xf32, #tpu.memory_space<vmem>>, vector<1x32xf32>
    %c188 = arith.constant 188 : index
    %c0_37 = arith.constant 0 : index
    %119 = vector.load %arg3[%c188, %c0_37] : memref<193x32xf32, #tpu.memory_space<vmem>>, vector<1x32xf32>
    %120 = arith.addf %102, %9 : vector<16x16xf32>
    %cst_38 = arith.constant dense<0.000000e+00> : vector<16xf32>
    %121 = vector.multi_reduction <add>, %120, %cst_38 [1] : vector<16x16xf32> to vector<16xf32>
    %122 = vector.shape_cast %121 : vector<16xf32> to vector<16x1xf32>
    %123 = math.rsqrt %122 : vector<16x1xf32>
    %cst_39 = arith.constant dense<0.000000e+00> : vector<16xf32>
    %124 = vector.multi_reduction <add>, %120, %cst_39 [0] : vector<16x16xf32> to vector<16xf32>
    %125 = vector.shape_cast %124 : vector<16xf32> to vector<1x16xf32>
    %126 = math.rsqrt %125 : vector<1x16xf32>
    %127 = vector.broadcast %123 : vector<16x1xf32> to vector<16x16xf32>
    %128 = arith.mulf %120, %127 : vector<16x16xf32>
    %129 = vector.broadcast %126 : vector<1x16xf32> to vector<16x16xf32>
    %130 = arith.mulf %128, %129 : vector<16x16xf32>
    %cst_40 = arith.constant dense<0.000000e+00> : vector<16x32xf32>
    %131 = tpu.matmul %98, %117, %cst_40 {dimension_numbers = #tpu.dot_dimension_numbers<[1], [0], [0], [1], [0, 0, 1, 1], [], []>} : vector<16x32xf32>, vector<32x32xf32>, vector<16x32xf32> -> vector<16x32xf32>
    %cst_41 = arith.constant dense<0.000000e+00> : vector<16x32xf32>
    %132 = tpu.matmul %130, %131, %cst_41 {dimension_numbers = #tpu.dot_dimension_numbers<[1], [0], [0], [1], [0, 0, 1, 1], [], []>} : vector<16x16xf32>, vector<16x32xf32>, vector<16x32xf32> -> vector<16x32xf32>
    %133 = vector.broadcast %118 : vector<1x32xf32> to vector<16x32xf32>
    %134 = arith.addf %132, %133 : vector<16x32xf32>
    %cst_42 = arith.constant 0.000000e+00 : f32
    %135 = vector.broadcast %cst_42 : f32 to vector<16x32xf32>
    %136 = arith.maximumf %134, %135 : vector<16x32xf32>
    %137 = arith.mulf %119, %119 : vector<1x32xf32>
    %138 = vector.shape_cast %137 : vector<1x32xf32> to vector<1x1x32xf32>
    %cst_43 = arith.constant dense<0.000000e+00> : vector<1xf32>
    %139 = vector.multi_reduction <add>, %138, %cst_43 [1, 2] : vector<1x1x32xf32> to vector<1xf32>
    %140 = vector.shape_cast %139 : vector<1xf32> to vector<1x1x1xf32>
    %141 = vector.extract %140[0, 0, 0] : f32 from vector<1x1x1xf32>
    %142 = math.rsqrt %141 : f32
    %143 = vector.broadcast %119 : vector<1x32xf32> to vector<16x32xf32>
    %144 = arith.mulf %136, %143 : vector<16x32xf32>
    %cst_44 = arith.constant dense<0.000000e+00> : vector<16xf32>
    %145 = vector.multi_reduction <add>, %144, %cst_44 [1] : vector<16x32xf32> to vector<16xf32>
    %146 = vector.shape_cast %145 : vector<16xf32> to vector<16x1xf32>
    %147 = vector.broadcast %142 : f32 to vector<16x1xf32>
    %148 = arith.mulf %146, %147 : vector<16x1xf32>
    %cst_45 = arith.constant 5.000000e-01 : f32
    %149 = vector.broadcast %cst_45 : f32 to vector<16x1xf32>
    %150 = arith.cmpf ogt, %87, %149 : vector<16x1xf32>
    %cst_46 = arith.constant -1.000000e+30 : f32
    %151 = vector.broadcast %cst_46 : f32 to vector<16x1xf32>
    %152 = arith.select %150, %148, %151 : vector<16x1xi1>, vector<16x1xf32>
    %153 = vector.broadcast %152 : vector<16x1xf32> to vector<16x16xf32>
    %154 = arith.mulf %153, %9 : vector<16x16xf32>
    %cst_47 = arith.constant dense<0.000000e+00> : vector<16xf32>
    %155 = vector.multi_reduction <add>, %154, %cst_47 [0] : vector<16x16xf32> to vector<16xf32>
    %156 = vector.shape_cast %155 : vector<16xf32> to vector<1x16xf32>
    %157 = vector.broadcast %152 : vector<16x1xf32> to vector<16x16xf32>
    %158 = vector.broadcast %156 : vector<1x16xf32> to vector<16x16xf32>
    %159 = arith.cmpf ogt, %157, %158 : vector<16x16xf32>
    %160 = vector.broadcast %152 : vector<16x1xf32> to vector<16x16xf32>
    %161 = vector.broadcast %156 : vector<1x16xf32> to vector<16x16xf32>
    %162 = arith.cmpf oeq, %160, %161 : vector<16x16xf32>
    %163 = arith.cmpi slt, %4, %5 : vector<16x16xi32>
    %164 = arith.andi %162, %163 : vector<16x16xi1>
    %165 = arith.ori %159, %164 : vector<16x16xi1>
    %166 = arith.andi %6, %165 : vector<16x16xi1>
    %167 = vector.broadcast %156 : vector<1x16xf32> to vector<16x16xf32>
    %168 = vector.broadcast %152 : vector<16x1xf32> to vector<16x16xf32>
    %169 = arith.cmpf ogt, %167, %168 : vector<16x16xf32>
    %170 = vector.broadcast %156 : vector<1x16xf32> to vector<16x16xf32>
    %171 = vector.broadcast %152 : vector<16x1xf32> to vector<16x16xf32>
    %172 = arith.cmpf oeq, %170, %171 : vector<16x16xf32>
    %173 = arith.cmpi slt, %5, %4 : vector<16x16xi32>
    %174 = arith.andi %172, %173 : vector<16x16xi1>
    %175 = arith.ori %169, %174 : vector<16x16xi1>
    %176 = arith.andi %6, %175 : vector<16x16xi1>
    %177 = arith.extui %176 : vector<16x16xi1> to vector<16x16xi32>
    %178 = arith.sitofp %177 : vector<16x16xi32> to vector<16x16xf32>
    %cst_48 = arith.constant dense<0.000000e+00> : vector<16xf32>
    %179 = vector.multi_reduction <add>, %178, %cst_48 [1] : vector<16x16xf32> to vector<16xf32>
    %180 = vector.shape_cast %179 : vector<16xf32> to vector<16x1xf32>
    %181 = arith.extui %166 : vector<16x16xi1> to vector<16x16xi32>
    %182 = arith.sitofp %181 : vector<16x16xi32> to vector<16x16xf32>
    %cst_49 = arith.constant dense<0.000000e+00> : vector<16xf32>
    %183 = vector.multi_reduction <add>, %182, %cst_49 [0] : vector<16x16xf32> to vector<16xf32>
    %184 = vector.shape_cast %183 : vector<16xf32> to vector<1x16xf32>
    %cst_50 = arith.constant 4.000000e+00 : f32
    %185 = vector.broadcast %cst_50 : f32 to vector<16x1xf32>
    %186 = arith.cmpf olt, %180, %185 : vector<16x1xf32>
    %cst_51 = arith.constant 1.000000e+00 : f32
    %cst_52 = arith.constant 0.000000e+00 : f32
    %187 = vector.broadcast %cst_51 : f32 to vector<16x1xf32>
    %188 = vector.broadcast %cst_52 : f32 to vector<16x1xf32>
    %189 = arith.select %186, %187, %188 : vector<16x1xi1>, vector<16x1xf32>
    %190 = arith.mulf %189, %87 : vector<16x1xf32>
    %cst_53 = arith.constant 4.000000e+00 : f32
    %191 = vector.broadcast %cst_53 : f32 to vector<1x16xf32>
    %192 = arith.cmpf olt, %184, %191 : vector<1x16xf32>
    %cst_54 = arith.constant 1.000000e+00 : f32
    %cst_55 = arith.constant 0.000000e+00 : f32
    %193 = vector.broadcast %cst_54 : f32 to vector<1x16xf32>
    %194 = vector.broadcast %cst_55 : f32 to vector<1x16xf32>
    %195 = arith.select %192, %193, %194 : vector<1x16xi1>, vector<1x16xf32>
    %196 = arith.mulf %195, %93 : vector<1x16xf32>
    %197 = math.tanh %148 : vector<16x1xf32>
    %198 = vector.broadcast %197 : vector<16x1xf32> to vector<16x32xf32>
    %199 = arith.mulf %136, %198 : vector<16x32xf32>
    %200 = vector.broadcast %190 : vector<16x1xf32> to vector<16x32xf32>
    %201 = arith.mulf %199, %200 : vector<16x32xf32>
    %202 = vector.broadcast %190 : vector<16x1xf32> to vector<16x16xf32>
    %203 = arith.mulf %102, %202 : vector<16x16xf32>
    %204 = vector.broadcast %196 : vector<1x16xf32> to vector<16x16xf32>
    %205 = arith.mulf %203, %204 : vector<16x16xf32>
    %cst_56 = arith.constant 5.000000e-01 : f32
    %206 = vector.broadcast %cst_56 : f32 to vector<16x1xf32>
    %207 = arith.cmpf ogt, %190, %206 : vector<16x1xf32>
    %cst_57 = arith.constant -1.000000e+30 : f32
    %208 = vector.shape_cast %207 : vector<16x1xi1> to vector<16x1xi1>
    %209 = vector.broadcast %208 : vector<16x1xi1> to vector<16x32xi1>
    %210 = vector.broadcast %cst_57 : f32 to vector<16x32xf32>
    %211 = arith.select %209, %201, %210 : vector<16x32xi1>, vector<16x32xf32>
    %cst_58 = arith.constant dense<0xFF800000> : vector<32xf32>
    %212 = vector.multi_reduction <maximumf>, %211, %cst_58 [0] : vector<16x32xf32> to vector<32xf32>
    %213 = vector.shape_cast %212 : vector<32xf32> to vector<1x32xf32>
    %214 = arith.addf %111, %213 : vector<1x32xf32>
    %cst_59 = arith.constant dense<0.000000e+00> : vector<32xf32>
    %215 = vector.multi_reduction <add>, %201, %cst_59 [0] : vector<16x32xf32> to vector<32xf32>
    %216 = vector.shape_cast %215 : vector<32xf32> to vector<1x32xf32>
    %cst_60 = arith.constant 2.500000e-01 : f32
    %217 = vector.broadcast %cst_60 : f32 to vector<1x32xf32>
    %218 = arith.mulf %216, %217 : vector<1x32xf32>
    %219 = arith.addf %116, %218 : vector<1x32xf32>
    %c40 = arith.constant 40 : index
    %c0_61 = arith.constant 0 : index
    %220 = vector.load %arg3[%c40, %c0_61] : memref<193x32xf32, #tpu.memory_space<vmem>>, vector<32x32xf32>
    %c186 = arith.constant 186 : index
    %c0_62 = arith.constant 0 : index
    %221 = vector.load %arg3[%c186, %c0_62] : memref<193x32xf32, #tpu.memory_space<vmem>>, vector<1x32xf32>
    %c189 = arith.constant 189 : index
    %c0_63 = arith.constant 0 : index
    %222 = vector.load %arg3[%c189, %c0_63] : memref<193x32xf32, #tpu.memory_space<vmem>>, vector<1x32xf32>
    %223 = arith.addf %205, %9 : vector<16x16xf32>
    %cst_64 = arith.constant dense<0.000000e+00> : vector<16xf32>
    %224 = vector.multi_reduction <add>, %223, %cst_64 [1] : vector<16x16xf32> to vector<16xf32>
    %225 = vector.shape_cast %224 : vector<16xf32> to vector<16x1xf32>
    %226 = math.rsqrt %225 : vector<16x1xf32>
    %cst_65 = arith.constant dense<0.000000e+00> : vector<16xf32>
    %227 = vector.multi_reduction <add>, %223, %cst_65 [0] : vector<16x16xf32> to vector<16xf32>
    %228 = vector.shape_cast %227 : vector<16xf32> to vector<1x16xf32>
    %229 = math.rsqrt %228 : vector<1x16xf32>
    %230 = vector.broadcast %226 : vector<16x1xf32> to vector<16x16xf32>
    %231 = arith.mulf %223, %230 : vector<16x16xf32>
    %232 = vector.broadcast %229 : vector<1x16xf32> to vector<16x16xf32>
    %233 = arith.mulf %231, %232 : vector<16x16xf32>
    %cst_66 = arith.constant dense<0.000000e+00> : vector<16x32xf32>
    %234 = tpu.matmul %201, %220, %cst_66 {dimension_numbers = #tpu.dot_dimension_numbers<[1], [0], [0], [1], [0, 0, 1, 1], [], []>} : vector<16x32xf32>, vector<32x32xf32>, vector<16x32xf32> -> vector<16x32xf32>
    %cst_67 = arith.constant dense<0.000000e+00> : vector<16x32xf32>
    %235 = tpu.matmul %233, %234, %cst_67 {dimension_numbers = #tpu.dot_dimension_numbers<[1], [0], [0], [1], [0, 0, 1, 1], [], []>} : vector<16x16xf32>, vector<16x32xf32>, vector<16x32xf32> -> vector<16x32xf32>
    %236 = vector.broadcast %221 : vector<1x32xf32> to vector<16x32xf32>
    %237 = arith.addf %235, %236 : vector<16x32xf32>
    %cst_68 = arith.constant 0.000000e+00 : f32
    %238 = vector.broadcast %cst_68 : f32 to vector<16x32xf32>
    %239 = arith.maximumf %237, %238 : vector<16x32xf32>
    %240 = arith.mulf %222, %222 : vector<1x32xf32>
    %241 = vector.shape_cast %240 : vector<1x32xf32> to vector<1x1x32xf32>
    %cst_69 = arith.constant dense<0.000000e+00> : vector<1xf32>
    %242 = vector.multi_reduction <add>, %241, %cst_69 [1, 2] : vector<1x1x32xf32> to vector<1xf32>
    %243 = vector.shape_cast %242 : vector<1xf32> to vector<1x1x1xf32>
    %244 = vector.extract %243[0, 0, 0] : f32 from vector<1x1x1xf32>
    %245 = math.rsqrt %244 : f32
    %246 = vector.broadcast %222 : vector<1x32xf32> to vector<16x32xf32>
    %247 = arith.mulf %239, %246 : vector<16x32xf32>
    %cst_70 = arith.constant dense<0.000000e+00> : vector<16xf32>
    %248 = vector.multi_reduction <add>, %247, %cst_70 [1] : vector<16x32xf32> to vector<16xf32>
    %249 = vector.shape_cast %248 : vector<16xf32> to vector<16x1xf32>
    %250 = vector.broadcast %245 : f32 to vector<16x1xf32>
    %251 = arith.mulf %249, %250 : vector<16x1xf32>
    %cst_71 = arith.constant 5.000000e-01 : f32
    %252 = vector.broadcast %cst_71 : f32 to vector<16x1xf32>
    %253 = arith.cmpf ogt, %190, %252 : vector<16x1xf32>
    %cst_72 = arith.constant -1.000000e+30 : f32
    %254 = vector.broadcast %cst_72 : f32 to vector<16x1xf32>
    %255 = arith.select %253, %251, %254 : vector<16x1xi1>, vector<16x1xf32>
    %256 = vector.broadcast %255 : vector<16x1xf32> to vector<16x16xf32>
    %257 = arith.mulf %256, %9 : vector<16x16xf32>
    %cst_73 = arith.constant dense<0.000000e+00> : vector<16xf32>
    %258 = vector.multi_reduction <add>, %257, %cst_73 [0] : vector<16x16xf32> to vector<16xf32>
    %259 = vector.shape_cast %258 : vector<16xf32> to vector<1x16xf32>
    %260 = vector.broadcast %259 : vector<1x16xf32> to vector<16x16xf32>
    %261 = vector.broadcast %255 : vector<16x1xf32> to vector<16x16xf32>
    %262 = arith.cmpf ogt, %260, %261 : vector<16x16xf32>
    %263 = vector.broadcast %259 : vector<1x16xf32> to vector<16x16xf32>
    %264 = vector.broadcast %255 : vector<16x1xf32> to vector<16x16xf32>
    %265 = arith.cmpf oeq, %263, %264 : vector<16x16xf32>
    %266 = arith.cmpi slt, %5, %4 : vector<16x16xi32>
    %267 = arith.andi %265, %266 : vector<16x16xi1>
    %268 = arith.ori %262, %267 : vector<16x16xi1>
    %269 = arith.andi %6, %268 : vector<16x16xi1>
    %270 = arith.extui %269 : vector<16x16xi1> to vector<16x16xi32>
    %271 = arith.sitofp %270 : vector<16x16xi32> to vector<16x16xf32>
    %cst_74 = arith.constant dense<0.000000e+00> : vector<16xf32>
    %272 = vector.multi_reduction <add>, %271, %cst_74 [1] : vector<16x16xf32> to vector<16xf32>
    %273 = vector.shape_cast %272 : vector<16xf32> to vector<16x1xf32>
    %cst_75 = arith.constant 2.000000e+00 : f32
    %274 = vector.broadcast %cst_75 : f32 to vector<16x1xf32>
    %275 = arith.cmpf olt, %273, %274 : vector<16x1xf32>
    %cst_76 = arith.constant 1.000000e+00 : f32
    %cst_77 = arith.constant 0.000000e+00 : f32
    %276 = vector.broadcast %cst_76 : f32 to vector<16x1xf32>
    %277 = vector.broadcast %cst_77 : f32 to vector<16x1xf32>
    %278 = arith.select %275, %276, %277 : vector<16x1xi1>, vector<16x1xf32>
    %279 = arith.mulf %278, %190 : vector<16x1xf32>
    %280 = math.tanh %251 : vector<16x1xf32>
    %281 = vector.broadcast %280 : vector<16x1xf32> to vector<16x32xf32>
    %282 = arith.mulf %239, %281 : vector<16x32xf32>
    %283 = vector.broadcast %279 : vector<16x1xf32> to vector<16x32xf32>
    %284 = arith.mulf %282, %283 : vector<16x32xf32>
    %cst_78 = arith.constant 5.000000e-01 : f32
    %285 = vector.broadcast %cst_78 : f32 to vector<16x1xf32>
    %286 = arith.cmpf ogt, %279, %285 : vector<16x1xf32>
    %cst_79 = arith.constant -1.000000e+30 : f32
    %287 = vector.shape_cast %286 : vector<16x1xi1> to vector<16x1xi1>
    %288 = vector.broadcast %287 : vector<16x1xi1> to vector<16x32xi1>
    %289 = vector.broadcast %cst_79 : f32 to vector<16x32xf32>
    %290 = arith.select %288, %284, %289 : vector<16x32xi1>, vector<16x32xf32>
    %cst_80 = arith.constant dense<0xFF800000> : vector<32xf32>
    %291 = vector.multi_reduction <maximumf>, %290, %cst_80 [0] : vector<16x32xf32> to vector<32xf32>
    %292 = vector.shape_cast %291 : vector<32xf32> to vector<1x32xf32>
    %293 = arith.addf %214, %292 : vector<1x32xf32>
    %cst_81 = arith.constant dense<0.000000e+00> : vector<32xf32>
    %294 = vector.multi_reduction <add>, %284, %cst_81 [0] : vector<16x32xf32> to vector<32xf32>
    %295 = vector.shape_cast %294 : vector<32xf32> to vector<1x32xf32>
    %cst_82 = arith.constant 5.000000e-01 : f32
    %296 = vector.broadcast %cst_82 : f32 to vector<1x32xf32>
    %297 = arith.mulf %295, %296 : vector<1x32xf32>
    %298 = arith.addf %219, %297 : vector<1x32xf32>
    %c72 = arith.constant 72 : index
    %c0_83 = arith.constant 0 : index
    %299 = vector.load %arg3[%c72, %c0_83] : memref<193x32xf32, #tpu.memory_space<vmem>>, vector<32x32xf32>
    %cst_84 = arith.constant dense<0.000000e+00> : vector<1x32xf32>
    %300 = tpu.matmul %293, %299, %cst_84 {dimension_numbers = #tpu.dot_dimension_numbers<[1], [0], [0], [1], [0, 0, 1, 1], [], []>} : vector<1x32xf32>, vector<32x32xf32>, vector<1x32xf32> -> vector<1x32xf32>
    %c104 = arith.constant 104 : index
    %c0_85 = arith.constant 0 : index
    %301 = vector.load %arg3[%c104, %c0_85] : memref<193x32xf32, #tpu.memory_space<vmem>>, vector<32x32xf32>
    %cst_86 = arith.constant dense<0.000000e+00> : vector<1x32xf32>
    %302 = tpu.matmul %298, %301, %cst_86 {dimension_numbers = #tpu.dot_dimension_numbers<[1], [0], [0], [1], [0, 0, 1, 1], [], []>} : vector<1x32xf32>, vector<32x32xf32>, vector<1x32xf32> -> vector<1x32xf32>
    %303 = arith.addf %300, %302 : vector<1x32xf32>
    %c190 = arith.constant 190 : index
    %c0_87 = arith.constant 0 : index
    %304 = vector.load %arg3[%c190, %c0_87] : memref<193x32xf32, #tpu.memory_space<vmem>>, vector<1x32xf32>
    %305 = arith.addf %303, %304 : vector<1x32xf32>
    %cst_88 = arith.constant 0.000000e+00 : f32
    %306 = vector.broadcast %cst_88 : f32 to vector<1x32xf32>
    %307 = arith.maximumf %305, %306 : vector<1x32xf32>
    %c136 = arith.constant 136 : index
    %c0_89 = arith.constant 0 : index
    %308 = vector.load %arg3[%c136, %c0_89] : memref<193x32xf32, #tpu.memory_space<vmem>>, vector<32x16xf32>
    %cst_90 = arith.constant dense<0.000000e+00> : vector<1x16xf32>
    %309 = tpu.matmul %307, %308, %cst_90 {dimension_numbers = #tpu.dot_dimension_numbers<[1], [0], [0], [1], [0, 0, 1, 1], [], []>} : vector<1x32xf32>, vector<32x16xf32>, vector<1x16xf32> -> vector<1x16xf32>
    %c191 = arith.constant 191 : index
    %c0_91 = arith.constant 0 : index
    %310 = vector.load %arg3[%c191, %c0_91] : memref<193x32xf32, #tpu.memory_space<vmem>>, vector<1x16xf32>
    %311 = arith.addf %309, %310 : vector<1x16xf32>
    %cst_92 = arith.constant 0.000000e+00 : f32
    %312 = vector.broadcast %cst_92 : f32 to vector<1x16xf32>
    %313 = arith.maximumf %311, %312 : vector<1x16xf32>
    %c168 = arith.constant 168 : index
    %c0_93 = arith.constant 0 : index
    %314 = vector.load %arg3[%c168, %c0_93] : memref<193x32xf32, #tpu.memory_space<vmem>>, vector<16x2xf32>
    %cst_94 = arith.constant dense<0.000000e+00> : vector<1x2xf32>
    %315 = tpu.matmul %313, %314, %cst_94 {dimension_numbers = #tpu.dot_dimension_numbers<[1], [0], [0], [1], [0, 0, 1, 1], [], []>} : vector<1x16xf32>, vector<16x2xf32>, vector<1x2xf32> -> vector<1x2xf32>
    %c192 = arith.constant 192 : index
    %c0_95 = arith.constant 0 : index
    %316 = vector.load %arg3[%c192, %c0_95] : memref<193x32xf32, #tpu.memory_space<vmem>>, vector<1x2xf32>
    %317 = arith.addf %315, %316 : vector<1x2xf32>
    %cst_96 = arith.constant dense<0xFF800000> : vector<1xf32>
    %318 = vector.multi_reduction <maximumf>, %317, %cst_96 [1] : vector<1x2xf32> to vector<1xf32>
    %319 = vector.shape_cast %318 : vector<1xf32> to vector<1x1xf32>
    %320 = vector.broadcast %319 : vector<1x1xf32> to vector<1x2xf32>
    %321 = arith.subf %317, %320 : vector<1x2xf32>
    %322 = math.exp %321 : vector<1x2xf32>
    %cst_97 = arith.constant dense<0.000000e+00> : vector<1xf32>
    %323 = vector.multi_reduction <add>, %322, %cst_97 [1] : vector<1x2xf32> to vector<1xf32>
    %324 = vector.shape_cast %323 : vector<1xf32> to vector<1x1xf32>
    %325 = math.log %324 : vector<1x1xf32>
    %326 = vector.broadcast %325 : vector<1x1xf32> to vector<1x2xf32>
    %327 = arith.subf %321, %326 : vector<1x2xf32>
    %c0_98 = arith.constant 0 : index
    %c0_99 = arith.constant 0 : index
    %c0_100 = arith.constant 0 : index
    %328 = vector.load %arg4[%c0_98, %c0_99, %c0_100] : memref<1x1x2xf32, #tpu.memory_space<vmem>>, vector<1x1x2xf32>
    %329 = vector.shape_cast %328 : vector<1x1x2xf32> to vector<1x2xf32>
    %330 = vector.shape_cast %327 : vector<1x2xf32> to vector<1x1x2xf32>
    tpu.vector_store %arg4[%c0_98, %c0_99, %c0_100], %330 {strides = array<i32>} : memref<1x1x2xf32, #tpu.memory_space<vmem>>, vector<1x1x2xf32>,
    return
  }
  func.func @transform_0(%arg0: i32) -> (i32, i32, i32) {
    %c0_i32 = arith.constant 0 : i32
    %c0_i32_0 = arith.constant 0 : i32
    %c0_i32_1 = arith.constant 0 : i32
    return %arg0, %c0_i32, %c0_i32_0 : i32, i32, i32
  }
  func.func @transform_1(%arg0: i32) -> (i32, i32, i32) {
    %c0_i32 = arith.constant 0 : i32
    %c0_i32_0 = arith.constant 0 : i32
    %c0_i32_1 = arith.constant 0 : i32
    return %arg0, %c0_i32, %c0_i32_0 : i32, i32, i32
  }
  func.func @transform_2(%arg0: i32) -> (i32, i32) {
    %c0_i32 = arith.constant 0 : i32
    %c0_i32_0 = arith.constant 0 : i32
    %c0_i32_1 = arith.constant 0 : i32
    return %c0_i32, %c0_i32_0 : i32, i32
  }
  func.func @transform_3(%arg0: i32) -> (i32, i32, i32) {
    %c0_i32 = arith.constant 0 : i32
    %c0_i32_0 = arith.constant 0 : i32
    %c0_i32_1 = arith.constant 0 : i32
    return %arg0, %c0_i32, %c0_i32_0 : i32, i32, i32
  }
}

</mosaic_0001>

<llo_original>
// kernel: net_forward.1
$region0: #{net_forward.1}
  #allocation0 [shape = 'u32[]', space=smem, size = 0x4, offset = 0x4, fixed_abs, tag = 'smem constant byte address 0x4 - core index']
  #allocation1 [shape = 'u32[144,128]{1,0:T(1,128)}', space=vmem, size = 0x12000, scoped, tag = 'internal scratch']
  %s0 = inlined_call_operand.vmem [shape: f32[4,16,8], index: 0, kind: input, shape index: {}]
  %s1 = inlined_call_operand.vmem [shape: f32[4,16,16], index: 1, kind: input, shape index: {}]
  %s2 = inlined_call_operand.vmem [shape: f32[193,32], index: 2, kind: input, shape index: {}]
  %s3 = inlined_call_operand.vmem [shape: f32[4,1,2], index: 3, kind: output, shape index: {}]
  %s4 = sld [smem:[#allocation0]]
  $region45: #{net_forward.1} parent=0
    _
  %s6 = ssub.s32 1, %s4
  %s7 = scalar_select 0, %s6, %s4
  loop: start=0, step=1, limit=6
  $region2: #{net_forward.1} parent=0 // loop_pre_header
    _
  $region3: #{net_forward.1} parent=0 // loop_header
    %s9 = sphi 0, %s13
    %p10 = scmp.ge.s32.totalorder %s9, 6
    %s19 = sphi 0, %s21
    %s22 = sphi 0, %s19
    %s23 = sphi 0, %s22
    %s39 = sphi 0, %s23
    %s45 = sphi 0, %s47
    %s48 = sphi 0, %s45
    %s49 = sphi 0, %s48
    %s65 = sphi 0, %s49
    %s69 = sphi 0, %s69
    %s71 = sphi 0, %s69
    %s72 = sphi 0, %s71
    %s86 = sphi 0, %s72
    %s92 = sphi 0, %s94
    %s95 = sphi 0, %s92
    %s96 = sphi 0, %s95
    %s112 = sphi 0, %s96
  $region4: #{net_forward.1} parent=0 // loop_header_branch
    %12 = sbr.rel (%p10) target = $region8
  $region5: #{net_forward.1} parent=0 // loop_body
    %s14 = ssub.s32 %s9, 1
    %s15 = ssub.s32 %s9, 2
    %s16 = sadd.s32 %s9, 1
    %s17 = ssub.s32 %s9, %s16
    %p18 = scmp.eq.s32.totalorder %s17, 0
    %s20 = sadd.s32 %s19, 1
    %s21 = scalar_select %p18, %s19, %s20
    %p24 = pneg %p18
    %p25 = scmp.eq.s32.totalorder %s9, 3
    %p26 = por %p24, %p25
    %p27 = scmp.ne.s32.totalorder %s19, %s22
    %p28 = scmp.eq.s32.totalorder %s9, 0
    %p29 = por %p27, %p28
    %p30 = scmp.ne.s32.totalorder %s19, %s22
    %p31 = scmp.eq.s32.totalorder %s14, 3
    %p32 = por %p30, %p31
    %p33 = scmp.ne.s32.totalorder %s22, %s23
    %p34 = scmp.eq.s32.totalorder %s14, 0
    %p35 = por %p33, %p34
    %p36 = scmp.ne.s32.totalorder %s22, %s23
    %p37 = scmp.eq.s32.totalorder %s15, 3
    %p38 = por %p36, %p37
    %p40 = scmp.ne.s32.totalorder %s23, %s39
    %p41 = scmp.eq.s32.totalorder %s15, 0
    %p42 = por %p40, %p41
    %s43 = ssub.s32 %s9, %s16
    %p44 = scmp.eq.s32.totalorder %s43, 0
    %s46 = sadd.s32 %s45, 1
    %s47 = scalar_select %p44, %s45, %s46
    %p50 = pneg %p44
    %p51 = scmp.eq.s32.totalorder %s9, 3
    %p52 = por %p50, %p51
    %p53 = scmp.ne.s32.totalorder %s45, %s48
    %p54 = scmp.eq.s32.totalorder %s9, 0
    %p55 = por %p53, %p54
    %p56 = scmp.ne.s32.totalorder %s45, %s48
    %p57 = scmp.eq.s32.totalorder %s14, 3
    %p58 = por %p56, %p57
    %p59 = scmp.ne.s32.totalorder %s48, %s49
    %p60 = scmp.eq.s32.totalorder %s14, 0
    %p61 = por %p59, %p60
    %p62 = scmp.ne.s32.totalorder %s48, %s49
    %p63 = scmp.eq.s32.totalorder %s15, 3
    %p64 = por %p62, %p63
    %p66 = scmp.ne.s32.totalorder %s49, %s65
    %p67 = scmp.eq.s32.totalorder %s15, 0
    %p68 = por %p66, %p67
    %s70 = sadd.s32 %s69, 1
    %p73 = scmp.eq.s32.totalorder %s9, 3
    %p74 = scmp.ne.s32.totalorder %s69, %s71
    %p75 = scmp.eq.s32.totalorder %s9, 0
    %p76 = por %p74, %p75
    %p77 = scmp.ne.s32.totalorder %s69, %s71
    %p78 = scmp.eq.s32.totalorder %s14, 3
    %p79 = por %p77, %p78
    %p80 = scmp.ne.s32.totalorder %s71, %s72
    %p81 = scmp.eq.s32.totalorder %s14, 0
    %p82 = por %p80, %p81
    %p83 = scmp.ne.s32.totalorder %s71, %s72
    %p84 = scmp.eq.s32.totalorder %s15, 3
    %p85 = por %p83, %p84
    %p87 = scmp.ne.s32.totalorder %s72, %s86
    %p88 = scmp.eq.s32.totalorder %s15, 0
    %p89 = por %p87, %p88
    %s90 = ssub.s32 %s9, %s16
    %p91 = scmp.eq.s32.totalorder %s90, 0
    %s93 = sadd.s32 %s92, 1
    %s94 = scalar_select %p91, %s92, %s93
    %p97 = pneg %p91
    %p98 = scmp.eq.s32.totalorder %s9, 3
    %p99 = por %p97, %p98
    %p100 = scmp.ne.s32.totalorder %s92, %s95
    %p101 = scmp.eq.s32.totalorder %s9, 0
    %p102 = por %p100, %p101
    %p103 = scmp.ne.s32.totalorder %s92, %s95
    %p104 = scmp.eq.s32.totalorder %s14, 3
    %p105 = por %p103, %p104
    %p106 = scmp.ne.s32.totalorder %s95, %s96
    %p107 = scmp.eq.s32.totalorder %s14, 0
    %p108 = por %p106, %p107
    %p109 = scmp.ne.s32.totalorder %s95, %s96
    %p110 = scmp.eq.s32.totalorder %s15, 3
    %p111 = por %p109, %p110
    %p113 = scmp.ne.s32.totalorder %s96, %s112
    %p114 = scmp.eq.s32.totalorder %s15, 0
    %p115 = por %p113, %p114
    %p116 = scmp.le.s32.totalorder 1, %s9
    %p117 = scmp.lt.s32.totalorder %s9, 5
    %p118 = pnand %p116, %p117
    %p119 = pneg %p118
    // Predicated region
    $region9: #{net_forward.1} parent=5 // pred_check
      _
    $region10: #{net_forward.1} parent=5 // pred_check_branch
      %121 = sbr.rel (%p118) target = $region12
    $region11: #{net_forward.1} parent=5 // pred_region
      %s122 = ssub.s32 %s9, 1
      // Predicated region
      $region13: #{net_forward.1} parent=11 // pred_check
        %p123 = pneg %p82
      $region14: #{net_forward.1} parent=11 // pred_check_branch
        %125 = sbr.rel (%p123) target = $region16
      $region15: #{net_forward.1} parent=11 // pred_region
        _
      $region16: #{net_forward.1} parent=11 // pred_fallthru
        _
    $region12: #{net_forward.1} parent=5 // pred_fallthru
      _
    %p126 = scmp.lt.s32.totalorder %s9, 4
    // Predicated region
    $region17: #{net_forward.1} parent=5 // pred_check
      %p127 = pneg %p126
    $region18: #{net_forward.1} parent=5 // pred_check_branch
      %129 = sbr.rel (%p127) target = $region20
    $region19: #{net_forward.1} parent=5 // pred_region
      // Predicated region
      $region21: #{net_forward.1} parent=19 // pred_check
        %p130 = pneg %p29
      $region22: #{net_forward.1} parent=19 // pred_check_branch
        %132 = sbr.rel (%p130) target = $region24
      $region23: #{net_forward.1} parent=19 // pred_region
        %p133 = scmp.lt.s32.totalorder %s9, 3
        %s134 = scalar_select %p133, %s9, 3
        %s135 = smul.addr %s134, 2
        %s136 = smul.addr %s135, 8
        %s137 = scalar_lea.vmem %s0, %s136
      $region24: #{net_forward.1} parent=19 // pred_fallthru
        _
      // Predicated region
      $region25: #{net_forward.1} parent=19 // pred_check
        %p138 = pneg %p55
      $region26: #{net_forward.1} parent=19 // pred_check_branch
        %140 = sbr.rel (%p138) target = $region28
      $region27: #{net_forward.1} parent=19 // pred_region
        %p141 = scmp.lt.s32.totalorder %s9, 3
        %s142 = scalar_select %p141, %s9, 3
        %s143 = smul.addr %s142, 2
        %s144 = smul.addr %s143, 8
        %s145 = scalar_lea.vmem %s1, %s144
      $region28: #{net_forward.1} parent=19 // pred_fallthru
        _
    $region20: #{net_forward.1} parent=5 // pred_fallthru
      _
    %p146 = scmp.le.s32.totalorder 1, %s9
    %p147 = scmp.lt.s32.totalorder %s9, 5
    %p148 = pnand %p146, %p147
    %p149 = pneg %p148
    // Predicated region
    $region29: #{net_forward.1} parent=5 // pred_check
      _
    $region30: #{net_forward.1} parent=5 // pred_check_branch
      %151 = sbr.rel (%p148) target = $region32
    $region31: #{net_forward.1} parent=5 // pred_region
      %s152 = ssub.s32 %s9, 1
      %p153 = scmp.lt.s32.totalorder %s14, 3
      %s154 = scalar_select %p153, %s14, 3
      %s155 = smul.addr %s154, 2
      %s156 = smul.addr %s155, 8
      %s157 = scalar_lea.vmem %s0, %s156
      %p158 = pneg %p35
      %p159 = pneg %p32
      %p160 = scmp.lt.s32.totalorder %s14, 3
      %s161 = scalar_select %p160, %s14, 3
      %s162 = smul.addr %s161, 2
      %s163 = smul.addr %s162, 8
      %s164 = scalar_lea.vmem %s1, %s163
      %p165 = pneg %p61
      %p166 = pneg %p58
      %p167 = pneg %p82
      %p168 = pneg %p79
      %p169 = pneg %p108
      %p170 = pneg %p105
      %p171 = scmp.lt.s32.totalorder %s14, 3
      %s172 = scalar_select %p171, %s14, 3
      %s173 = scalar_lea.vmem %s3, %s172
      %p174 = scmp.lt.s32.totalorder %s14, 3
      %s175 = scalar_select %p174, %s14, 3
      %s176 = smul.addr %s175, 2
      %s177 = smul.addr %s176, 8
      %s178 = scalar_lea.vmem %s0, %s177
      %p179 = scmp.lt.s32.totalorder %s14, 3
      %s180 = scalar_select %p179, %s14, 3
      %s181 = smul.addr %s180, 2
      %s182 = smul.addr %s181, 8
      %s183 = scalar_lea.vmem %s1, %s182
      %p184 = scmp.lt.s32.totalorder %s14, 3
      %s185 = scalar_select %p184, %s14, 3
      %s186 = scalar_lea.vmem %s3, %s185
      %v187 = vld [vmem:[%s178] sm:$0xff]
      %v188 = vld [vmem:[%s178 + $0x8] sm:$0xff]
      %v189 = vld [vmem:[%s183] sm:$0xff]
      %v190 = vld [vmem:[%s183 + $0x8] sm:$0xff]
      %v191 = vlaneseq
      %v192 = vshrl.u32 %v191, 7
      %v193 = vadd.s32 %v192, 8
      %v194 = vlaneseq
      %v195 = vand.u32 %v194, 127
      %vm196 = vcmp.ne.s32.totalorder %v192, %v195
      %vm197 = vcmp.ne.s32.totalorder %v193, %v195
      %vm198 = vcmp.eq.s32.totalorder %v192, %v195
      %vm199 = vcmp.eq.s32.totalorder %v193, %v195
      %v200 = vsel %vm198, 1, 0
      %v201 = vsel %vm199, 1, 0
      %v202 = vcvt.s32.f32 %v200
      %v203 = vcvt.s32.f32 %v201
      %v204 = vld [vmem:[%s2] sm:$0xff]
      %v205 = vld [vmem:[%s2 + $0xb8] sm:$0x1]
      %v206 = vld [vmem:[%s2 + $0xbb] sm:$0x1]
      %v207 = vadd.f32 %v189, %v202
      %v208 = vadd.f32 %v190, %v203
      %vm209 = vcmask 130048
      %v210 = vsel %vm209, %v207, 0.0
      %211 = vadd.xlane.f32.xlu0 %v210
      %v212 = vpop.xlane.xlu0 %211
      %v213 = vsel %vm209, %v208, 0.0
      %214 = vadd.xlane.f32.xlu0 %v213
      %v215 = vpop.xlane.xlu0 %214
      %v216 = vrsqrt.pop %v212
      %v217 = vrsqrt.pop %v215
      %v218 = vadd.f32 %v210, %v213
      %v219 = vrot.slane %v218, 4
      %v220 = vadd.f32 %v218, %v219
      %v221 = vrot.slane %v220, 2
      %v222 = vadd.f32 %v220, %v221
      %v223 = vrot.slane %v222, 1
      %v224 = vadd.f32 %v222, %v223
      %v225 = vrsqrt.pop %v224
      %v226 = vmul.f32 %v207, %v216
      %v227 = vmul.f32 %v208, %v217
      %v228 = vmul.f32 %v226, %v225
      %v229 = vmul.f32 %v227, %v225
      %v231 = vsel %vm209, %v228, 0
      %v234 = vsel %vm209, %v229, 0
      %236 = vmatprep.subr.mxu0 0.0
      %237 = vmatpush1.msra.mxu0 0.0
      %238 = vmatprep.subr.mxu0 0.0
      %239 = vmatpush1.msra.mxu0 0.0
      %240 = vmatprep.subr.mxu0 0.0
      %241 = vmatpush1.msra.mxu0 0.0
      %242 = vmatprep.subr.mxu0 0.0
      %243 = vmatpush1.msra.mxu0 0.0
      %244 = vmatprep.subr.mxu0 0.0
      %245 = vmatpush1.msra.mxu0 0.0
      %246 = vmatprep.subr.mxu0 0.0
      %247 = vmatpush1.msra.mxu0 0.0
      %248 = vmatprep.subr.mxu0 0.0
      %249 = vmatpush1.msra.mxu0 0.0
      %250 = vmatprep.subr.mxu0 0.0
      %251 = vmatpush1.msra.mxu0 0.0
      %252 = vmatprep.subr.mxu0 0.0
      %253 = vmatpush1.msra.mxu0 0.0
      %254 = vmatprep.subr.mxu0 0.0
      %255 = vmatpush1.msra.mxu0 0.0
      %256 = vmatprep.subr.mxu0 0.0
      %257 = vmatpush1.msra.mxu0 0.0
      %258 = vmatprep.subr.mxu0 0.0
      %259 = vmatpush1.msra.mxu0 0.0
      %260 = vmatprep.subr.mxu0 0.0
      %261 = vmatpush1.msra.mxu0 0.0
      %262 = vmatprep.subr.mxu0 0.0
      %263 = vmatpush1.msra.mxu0 0.0
      %264 = vmatprep.subr.mxu0 0.0
      %265 = vmatpush1.msra.mxu0 %v188
      %266 = vmatprep.subr.mxu0 0.0
      %267 = vmatpush1.msra.mxu0 %v187
      %268 = vmatprep.subr.mxu0 0.0
      %269 = vmatpush2.msra.mxu0 0.0
      %270 = vmatprep.subr.mxu0 0.0
      %271 = vmatpush2.msra.mxu0 0.0
      %272 = vmatprep.subr.mxu0 0.0
      %273 = vmatpush2.msra.mxu0 0.0
      %274 = vmatprep.subr.mxu0 0.0
      %275 = vmatpush2.msra.mxu0 0.0
      %276 = vmatprep.subr.mxu0 0.0
      %277 = vmatpush2.msra.mxu0 0.0
      %278 = vmatprep.subr.mxu0 0.0
      %279 = vmatpush2.msra.mxu0 0.0
      %280 = vmatprep.subr.mxu0 0.0
      %281 = vmatpush2.msra.mxu0 0.0
      %282 = vmatprep.subr.mxu0 0.0
      %283 = vmatpush2.msra.mxu0 0.0
      %284 = vmatprep.subr.mxu0 0.0
      %285 = vmatpush2.msra.mxu0 0.0
      %286 = vmatprep.subr.mxu0 0.0
      %287 = vmatpush2.msra.mxu0 0.0
      %288 = vmatprep.subr.mxu0 0.0
      %289 = vmatpush2.msra.mxu0 0.0
      %290 = vmatprep.subr.mxu0 0.0
      %291 = vmatpush2.msra.mxu0 0.0
      %292 = vmatprep.subr.mxu0 0.0
      %293 = vmatpush2.msra.mxu0 0.0
      %294 = vmatprep.subr.mxu0 0.0
      %295 = vmatpush2.msra.mxu0 0.0
      %296 = vmatprep.subr.mxu0 0.0
      %297 = vmatpush2.msra.mxu0 0.0
      %298 = vmatprep.subr.mxu0 0.0
      %299 = vmatpush2.msra.mxu0 0.0
      %300 = vmatprep.mubr.f32.mxu0 0.0
      %301 = vmatmul.mubr.f32.gmra.mxu0 %v231
      %v302 = vpop.f32.mrf.mxu0
      %v303 = vadd.f32 0.0, %v302
      %v304 = vpop.f32.mrf.mxu0
      %305 = vmatprep.mubr.f32.mxu0 0.0
      %306 = vmatmul.mubr.f32.gmra.mxu0 %v234
      %v307 = vpop.f32.mrf.mxu0
      %v308 = vadd.f32 0.0, %v307
      %v309 = vpop.f32.mrf.mxu0
      %310 = vdwg.mxu0
      %v311 = vlaneseq
      %v312 = vshrl.u32 %v311, 7
      %v313 = vsub.s32 0, %v312
      %v314 = vrot.slane %v205, %v313
      %vm315 = vcmask 64512
      %v317 = vsel %vm315, %v303, 0
      %v320 = vsel %vm315, %v308, 0
      %322 = vmatprep.subr.mxu0 0.0
      %323 = vmatpush1.msra.mxu0 0.0
      %324 = vmatprep.subr.mxu0 0.0
      %325 = vmatpush1.msra.mxu0 0.0
      %326 = vmatprep.subr.mxu0 0.0
      %327 = vmatpush1.msra.mxu0 0.0
      %328 = vmatprep.subr.mxu0 0.0
      %329 = vmatpush1.msra.mxu0 0.0
      %330 = vmatprep.subr.mxu0 0.0
      %331 = vmatpush1.msra.mxu0 0.0
      %332 = vmatprep.subr.mxu0 0.0
      %333 = vmatpush1.msra.mxu0 0.0
      %334 = vmatprep.subr.mxu0 0.0
      %335 = vmatpush1.msra.mxu0 0.0
      %336 = vmatprep.subr.mxu0 0.0
      %337 = vmatpush1.msra.mxu0 0.0
      %338 = vmatprep.subr.mxu0 0.0
      %339 = vmatpush1.msra.mxu0 0.0
      %340 = vmatprep.subr.mxu0 0.0
      %341 = vmatpush1.msra.mxu0 0.0
      %342 = vmatprep.subr.mxu0 0.0
      %343 = vmatpush1.msra.mxu0 0.0
      %344 = vmatprep.subr.mxu0 0.0
      %345 = vmatpush1.msra.mxu0 0.0
      %346 = vmatprep.subr.mxu0 0.0
      %347 = vmatpush1.msra.mxu0 0.0
      %348 = vmatprep.subr.mxu0 0.0
      %349 = vmatpush1.msra.mxu0 0.0
      %350 = vmatprep.subr.mxu0 0.0
      %351 = vmatpush1.msra.mxu0 0.0
      %352 = vmatprep.subr.mxu0 0.0
      %353 = vmatpush1.msra.mxu0 %v204
      %354 = vmatprep.subr.mxu0 0.0
      %355 = vmatpush2.msra.mxu0 0.0
      %356 = vmatprep.subr.mxu0 0.0
      %357 = vmatpush2.msra.mxu0 0.0
      %358 = vmatprep.subr.mxu0 0.0
      %359 = vmatpush2.msra.mxu0 0.0
      %360 = vmatprep.subr.mxu0 0.0
      %361 = vmatpush2.msra.mxu0 0.0
      %362 = vmatprep.subr.mxu0 0.0
      %363 = vmatpush2.msra.mxu0 0.0
      %364 = vmatprep.subr.mxu0 0.0
      %365 = vmatpush2.msra.mxu0 0.0
      %366 = vmatprep.subr.mxu0 0.0
      %367 = vmatpush2.msra.mxu0 0.0
      %368 = vmatprep.subr.mxu0 0.0
      %369 = vmatpush2.msra.mxu0 0.0
      %370 = vmatprep.subr.mxu0 0.0
      %371 = vmatpush2.msra.mxu0 0.0
      %372 = vmatprep.subr.mxu0 0.0
      %373 = vmatpush2.msra.mxu0 0.0
      %374 = vmatprep.subr.mxu0 0.0
      %375 = vmatpush2.msra.mxu0 0.0
      %376 = vmatprep.subr.mxu0 0.0
      %377 = vmatpush2.msra.mxu0 0.0
      %378 = vmatprep.subr.mxu0 0.0
      %379 = vmatpush2.msra.mxu0 0.0
      %380 = vmatprep.subr.mxu0 0.0
      %381 = vmatpush2.msra.mxu0 0.0
      %382 = vmatprep.subr.mxu0 0.0
      %383 = vmatpush2.msra.mxu0 0.0
      %384 = vmatprep.subr.mxu0 0.0
      %385 = vmatpush2.msra.mxu0 0.0
      %386 = vmatprep.mubr.f32.mxu0 0.0
      %387 = vmatmul.mubr.f32.gmra.mxu0 %v317
      %v388 = vpop.f32.mrf.mxu0
      %v389 = vadd.f32 %v314, %v388
      %v390 = vpop.f32.mrf.mxu0
      %391 = vmatprep.mubr.f32.mxu0 0.0
      %392 = vmatmul.mubr.f32.gmra.mxu0 %v320
      %v393 = vpop.f32.mrf.mxu0
      %v394 = vadd.f32 %v314, %v393
      %v395 = vpop.f32.mrf.mxu0
      %396 = vdwg.mxu0
      %v397 = vmax.f32 %v389, 0.0
      %v398 = vmax.f32 %v394, 0.0
      %v399 = vmul.f32 %v206, %v206
      %vm400 = vcmask 253952
      %v401 = vsel %vm400, %v399, 0.0
      %402 = vadd.xlane.f32.xlu0 %v401
      %v403 = vpop.xlane.xlu0 %402
      %v404 = vrot.slane %v403, 4
      %v405 = vadd.f32 %v403, %v404
      %v406 = vrot.slane %v405, 2
      %v407 = vadd.f32 %v405, %v406
      %v408 = vrot.slane %v407, 1
      %v409 = vadd.f32 %v407, %v408
      %s410 = vtos %v409
      %v411 = vstv %s410
      %v412 = vrsqrt.pop %v411
      %s413 = vtos %v412
      %v414 = vlaneseq
      %v415 = vshrl.u32 %v414, 7
      %v416 = vsub.s32 0, %v415
      %v417 = vrot.slane %v206, %v416
      %v418 = vmul.f32 %v397, %v417
      %v419 = vmul.f32 %v398, %v417
      %vm420 = vcmask 261120
      %v421 = vsel %vm420, %v418, 0.0
      %422 = vadd.xlane.f32.xlu0 %v421
      %v423 = vpop.xlane.xlu0 %422
      %v424 = vsel %vm420, %v419, 0.0
      %425 = vadd.xlane.f32.xlu0 %v424
      %v426 = vpop.xlane.xlu0 %425
      %v427 = vstv %s413
      %v428 = vmul.f32 %v423, %v427
      %v429 = vmul.f32 %v426, %v427
      %vm430 = vcmp.gt.f32.partialorder 1.0, 0.5
      %v431 = vsel %vm430, %v428, -1e+30
      %v432 = vsel %vm430, %v429, -1e+30
      %v433 = vmul.f32 %v431, %v202
      %v434 = vmul.f32 %v432, %v203
      %v435 = vsel %vm209, %v433, 0.0
      %v436 = vsel %vm209, %v434, 0.0
      %v437 = vadd.f32 %v435, %v436
      %v438 = vrot.slane %v437, 4
      %v439 = vadd.f32 %v437, %v438
      %v440 = vrot.slane %v439, 2
      %v441 = vadd.f32 %v439, %v440
      %v442 = vrot.slane %v441, 1
      %v443 = vadd.f32 %v441, %v442
      %vm444 = vcmp.gt.f32.partialorder %v431, %v443
      %vm445 = vcmp.gt.f32.partialorder %v432, %v443
      %vm446 = vcmp.eq.f32.partialorder %v431, %v443
      %vm447 = vcmp.eq.f32.partialorder %v432, %v443
      %vm448 = vcmp.lt.s32.totalorder %v192, %v195
      %vm449 = vcmp.lt.s32.totalorder %v193, %v195
      %vm450 = vmand %vm446, %vm448
      %vm451 = vmand %vm447, %vm449
      %vm452 = vmor %vm444, %vm450
      %vm453 = vmor %vm445, %vm451
      %vm454 = vmand %vm196, %vm452
      %vm455 = vmand %vm197, %vm453
      %vm456 = vcmp.gt.f32.partialorder %v443, %v431
      %vm457 = vcmp.gt.f32.partialorder %v443, %v432
      %vm458 = vcmp.eq.f32.partialorder %v443, %v431
      %vm459 = vcmp.eq.f32.partialorder %v443, %v432
      %vm460 = vcmp.lt.s32.totalorder %v195, %v192
      %vm461 = vcmp.lt.s32.totalorder %v195, %v193
      %vm462 = vmand %vm458, %vm460
      %vm463 = vmand %vm459, %vm461
      %vm464 = vmor %vm456, %vm462
      %vm465 = vmor %vm457, %vm463
      %vm466 = vmand %vm196, %vm464
      %vm467 = vmand %vm197, %vm465
      %v468 = vsel %vm466, 1, 0
      %v469 = vsel %vm467, 1, 0
      %v470 = vcvt.s32.f32 %v468
      %v471 = vcvt.s32.f32 %v469
      %v472 = vsel %vm209, %v470, 0.0
      %473 = vadd.xlane.f32.xlu0 %v472
      %v474 = vpop.xlane.xlu0 %473
      %v475 = vsel %vm209, %v471, 0.0
      %476 = vadd.xlane.f32.xlu0 %v475
      %v477 = vpop.xlane.xlu0 %476
      %v478 = vsel %vm454, 1, 0
      %v479 = vsel %vm455, 1, 0
      %v480 = vcvt.s32.f32 %v478
      %v481 = vcvt.s32.f32 %v479
      %v482 = vsel %vm209, %v480, 0.0
      %v483 = vsel %vm209, %v481, 0.0
      %v484 = vadd.f32 %v482, %v483
      %v485 = vrot.slane %v484, 4
      %v486 = vadd.f32 %v484, %v485
      %v487 = vrot.slane %v486, 2
      %v488 = vadd.f32 %v486, %v487
      %v489 = vrot.slane %v488, 1
      %v490 = vadd.f32 %v488, %v489
      %vm491 = vcmp.lt.f32.partialorder %v474, 8.0
      %vm492 = vcmp.lt.f32.partialorder %v477, 8.0
      %v493 = vsel %vm491, 1.0, 0.0
      %v494 = vsel %vm492, 1.0, 0.0
      %vm495 = vcmp.lt.f32.partialorder %v490, 8.0
      %v496 = vsel %vm495, 1.0, 0.0
      %v497 = vtanh.pop %v428
      %v498 = vtanh.pop %v429
      %v499 = vmul.f32 %v397, %v497
      %v500 = vmul.f32 %v398, %v498
      %v501 = vmul.f32 %v499, %v493
      %v502 = vmul.f32 %v500, %v494
      %v503 = vmul.f32 %v189, %v493
      %v504 = vmul.f32 %v190, %v494
      %v505 = vmul.f32 %v503, %v496
      %v506 = vmul.f32 %v504, %v496
      %vm507 = vcmp.gt.f32.partialorder %v493, 0.5
      %vm508 = vcmp.gt.f32.partialorder %v494, 0.5
      %v509 = vsel %vm507, 1, 0
      %v510 = vsel %vm508, 1, 0
      %vm511 = vcmp.eq.s32.totalorder %v509, 1
      %vm512 = vcmp.eq.s32.totalorder %v510, 1
      %v513 = vsel %vm511, %v501, -1e+30
      %v514 = vsel %vm512, %v502, -1e+30
      %v515 = vsel %vm420, %v513, -inf
      %v516 = vsel %vm420, %v514, -inf
      %v517 = vmax.f32 %v515, %v516
      %v518 = vrot.slane %v517, 4
      %v519 = vmax.f32 %v517, %v518
      %v520 = vrot.slane %v519, 2
      %v521 = vmax.f32 %v519, %v520
      %v522 = vrot.slane %v521, 1
      %v523 = vmax.f32 %v521, %v522
      %v524 = vadd.f32 %v523, 0.0
      %v525 = vsel %vm420, %v501, 0.0
      %v526 = vsel %vm420, %v502, 0.0
      %v527 = vadd.f32 %v525, %v526
      %v528 = vrot.slane %v527, 4
      %v529 = vadd.f32 %v527, %v528
      %v530 = vrot.slane %v529, 2
      %v531 = vadd.f32 %v529, %v530
      %v532 = vrot.slane %v531, 1
      %v533 = vadd.f32 %v531, %v532
      %v534 = vmul.f32 %v533, 0.125
      %v535 = vadd.f32 %v534, 0.0
      %v536 = vld [vmem:[%s2 + $0x8] sm:$0xff]
      %v537 = vld [vmem:[%s2 + $0x10] sm:$0xff]
      %v538 = vld [vmem:[%s2 + $0x18] sm:$0xff]
      %v539 = vld [vmem:[%s2 + $0x20] sm:$0xff]
      %v540 = vld [vmem:[%s2 + $0xb9] sm:$0x1]
      %v541 = vld [vmem:[%s2 + $0xbc] sm:$0x1]
      %v542 = vadd.f32 %v505, %v202
      %v543 = vadd.f32 %v506, %v203
      %v544 = vsel %vm209, %v542, 0.0
      %545 = vadd.xlane.f32.xlu0 %v544
      %v546 = vpop.xlane.xlu0 %545
      %v547 = vsel %vm209, %v543, 0.0
      %548 = vadd.xlane.f32.xlu0 %v547
      %v549 = vpop.xlane.xlu0 %548
      %v550 = vrsqrt.pop %v546
      %v551 = vrsqrt.pop %v549
      %v552 = vadd.f32 %v544, %v547
      %v553 = vrot.slane %v552, 4
      %v554 = vadd.f32 %v552, %v553
      %v555 = vrot.slane %v554, 2
      %v556 = vadd.f32 %v554, %v555
      %v557 = vrot.slane %v556, 1
      %v558 = vadd.f32 %v556, %v557
      %v559 = vrsqrt.pop %v558
      %v560 = vmul.f32 %v542, %v550
      %v561 = vmul.f32 %v543, %v551
      %v562 = vmul.f32 %v560, %v559
      %v563 = vmul.f32 %v561, %v559
      %v565 = vsel %vm420, %v501, 0
      %v568 = vsel %vm420, %v502, 0
      %570 = vmatprep.subr.mxu0 0.0
      %571 = vmatpush1.msra.mxu0 0.0
      %572 = vmatprep.subr.mxu0 0.0
      %573 = vmatpush1.msra.mxu0 0.0
      %574 = vmatprep.subr.mxu0 0.0
      %575 = vmatpush1.msra.mxu0 0.0
      %576 = vmatprep.subr.mxu0 0.0
      %577 = vmatpush1.msra.mxu0 0.0
      %578 = vmatprep.subr.mxu0 0.0
      %579 = vmatpush1.msra.mxu0 0.0
      %580 = vmatprep.subr.mxu0 0.0
      %581 = vmatpush1.msra.mxu0 0.0
      %582 = vmatprep.subr.mxu0 0.0
      %583 = vmatpush1.msra.mxu0 0.0
      %584 = vmatprep.subr.mxu0 0.0
      %585 = vmatpush1.msra.mxu0 0.0
      %586 = vmatprep.subr.mxu0 0.0
      %587 = vmatpush1.msra.mxu0 0.0
      %588 = vmatprep.subr.mxu0 0.0
      %589 = vmatpush1.msra.mxu0 0.0
      %590 = vmatprep.subr.mxu0 0.0
      %591 = vmatpush1.msra.mxu0 0.0
      %592 = vmatprep.subr.mxu0 0.0
      %593 = vmatpush1.msra.mxu0 0.0
      %594 = vmatprep.subr.mxu0 0.0
      %595 = vmatpush1.msra.mxu0 %v539
      %596 = vmatprep.subr.mxu0 0.0
      %597 = vmatpush1.msra.mxu0 %v538
      %598 = vmatprep.subr.mxu0 0.0
      %599 = vmatpush1.msra.mxu0 %v537
      %600 = vmatprep.subr.mxu0 0.0
      %601 = vmatpush1.msra.mxu0 %v536
      %602 = vmatprep.subr.mxu0 0.0
      %603 = vmatpush2.msra.mxu0 0.0
      %604 = vmatprep.subr.mxu0 0.0
      %605 = vmatpush2.msra.mxu0 0.0
      %606 = vmatprep.subr.mxu0 0.0
      %607 = vmatpush2.msra.mxu0 0.0
      %608 = vmatprep.subr.mxu0 0.0
      %609 = vmatpush2.msra.mxu0 0.0
      %610 = vmatprep.subr.mxu0 0.0
      %611 = vmatpush2.msra.mxu0 0.0
      %612 = vmatprep.subr.mxu0 0.0
      %613 = vmatpush2.msra.mxu0 0.0
      %614 = vmatprep.subr.mxu0 0.0
      %615 = vmatpush2.msra.mxu0 0.0
      %616 = vmatprep.subr.mxu0 0.0
      %617 = vmatpush2.msra.mxu0 0.0
      %618 = vmatprep.subr.mxu0 0.0
      %619 = vmatpush2.msra.mxu0 0.0
      %620 = vmatprep.subr.mxu0 0.0
      %621 = vmatpush2.msra.mxu0 0.0
      %622 = vmatprep.subr.mxu0 0.0
      %623 = vmatpush2.msra.mxu0 0.0
      %624 = vmatprep.subr.mxu0 0.0
      %625 = vmatpush2.msra.mxu0 0.0
      %626 = vmatprep.subr.mxu0 0.0
      %627 = vmatpush2.msra.mxu0 0.0
      %628 = vmatprep.subr.mxu0 0.0
      %629 = vmatpush2.msra.mxu0 0.0
      %630 = vmatprep.subr.mxu0 0.0
      %631 = vmatpush2.msra.mxu0 0.0
      %632 = vmatprep.subr.mxu0 0.0
      %633 = vmatpush2.msra.mxu0 0.0
      %634 = vmatprep.mubr.f32.mxu0 0.0
      %635 = vmatmul.mubr.f32.gmra.mxu0 %v565
      %v636 = vpop.f32.mrf.mxu0
      %v637 = vadd.f32 0.0, %v636
      %v638 = vpop.f32.mrf.mxu0
      %639 = vmatprep.mubr.f32.mxu0 0.0
      %640 = vmatmul.mubr.f32.gmra.mxu0 %v568
      %v641 = vpop.f32.mrf.mxu0
      %v642 = vadd.f32 0.0, %v641
      %v643 = vpop.f32.mrf.mxu0
      %644 = vdwg.mxu0
      %v645 = vlaneseq
      %v646 = vshrl.u32 %v645, 7
      %v647 = vsub.s32 0, %v646
      %v648 = vrot.slane %v540, %v647
      %v650 = vsel %vm209, %v562, 0
      %v653 = vsel %vm209, %v563, 0
      %655 = vmatprep.subr.mxu0 0.0
      %656 = vmatpush1.msra.mxu0 0.0
      %657 = vmatprep.subr.mxu0 0.0
      %658 = vmatpush1.msra.mxu0 0.0
      %659 = vmatprep.subr.mxu0 0.0
      %660 = vmatpush1.msra.mxu0 0.0
      %661 = vmatprep.subr.mxu0 0.0
      %662 = vmatpush1.msra.mxu0 0.0
      %663 = vmatprep.subr.mxu0 0.0
      %664 = vmatpush1.msra.mxu0 0.0
      %665 = vmatprep.subr.mxu0 0.0
      %666 = vmatpush1.msra.mxu0 0.0
      %667 = vmatprep.subr.mxu0 0.0
      %668 = vmatpush1.msra.mxu0 0.0
      %669 = vmatprep.subr.mxu0 0.0
      %670 = vmatpush1.msra.mxu0 0.0
      %671 = vmatprep.subr.mxu0 0.0
      %672 = vmatpush1.msra.mxu0 0.0
      %673 = vmatprep.subr.mxu0 0.0
      %674 = vmatpush1.msra.mxu0 0.0
      %675 = vmatprep.subr.mxu0 0.0
      %676 = vmatpush1.msra.mxu0 0.0
      %677 = vmatprep.subr.mxu0 0.0
      %678 = vmatpush1.msra.mxu0 0.0
      %679 = vmatprep.subr.mxu0 0.0
      %680 = vmatpush1.msra.mxu0 0.0
      %681 = vmatprep.subr.mxu0 0.0
      %682 = vmatpush1.msra.mxu0 0.0
      %683 = vmatprep.subr.mxu0 0.0
      %684 = vmatpush1.msra.mxu0 %v642
      %685 = vmatprep.subr.mxu0 0.0
      %686 = vmatpush1.msra.mxu0 %v637
      %687 = vmatprep.subr.mxu0 0.0
      %688 = vmatpush2.msra.mxu0 0.0
      %689 = vmatprep.subr.mxu0 0.0
      %690 = vmatpush2.msra.mxu0 0.0
      %691 = vmatprep.subr.mxu0 0.0
      %692 = vmatpush2.msra.mxu0 0.0
      %693 = vmatprep.subr.mxu0 0.0
      %694 = vmatpush2.msra.mxu0 0.0
      %695 = vmatprep.subr.mxu0 0.0
      %696 = vmatpush2.msra.mxu0 0.0
      %697 = vmatprep.subr.mxu0 0.0
      %698 = vmatpush2.msra.mxu0 0.0
      %699 = vmatprep.subr.mxu0 0.0
      %700 = vmatpush2.msra.mxu0 0.0
      %701 = vmatprep.subr.mxu0 0.0
      %702 = vmatpush2.msra.mxu0 0.0
      %703 = vmatprep.subr.mxu0 0.0
      %704 = vmatpush2.msra.mxu0 0.0
      %705 = vmatprep.subr.mxu0 0.0
      %706 = vmatpush2.msra.mxu0 0.0
      %707 = vmatprep.subr.mxu0 0.0
      %708 = vmatpush2.msra.mxu0 0.0
      %709 = vmatprep.subr.mxu0 0.0
      %710 = vmatpush2.msra.mxu0 0.0
      %711 = vmatprep.subr.mxu0 0.0
      %712 = vmatpush2.msra.mxu0 0.0
      %713 = vmatprep.subr.mxu0 0.0
      %714 = vmatpush2.msra.mxu0 0.0
      %715 = vmatprep.subr.mxu0 0.0
      %716 = vmatpush2.msra.mxu0 0.0
      %717 = vmatprep.subr.mxu0 0.0
      %718 = vmatpush2.msra.mxu0 0.0
      %719 = vmatprep.mubr.f32.mxu0 0.0
      %720 = vmatmul.mubr.f32.gmra.mxu0 %v650
      %v721 = vpop.f32.mrf.mxu0
      %v722 = vadd.f32 %v648, %v721
      %v723 = vpop.f32.mrf.mxu0
      %724 = vmatprep.mubr.f32.mxu0 0.0
      %725 = vmatmul.mubr.f32.gmra.mxu0 %v653
      %v726 = vpop.f32.mrf.mxu0
      %v727 = vadd.f32 %v648, %v726
      %v728 = vpop.f32.mrf.mxu0
      %729 = vdwg.mxu0
      %v730 = vmax.f32 %v722, 0.0
      %v731 = vmax.f32 %v727, 0.0
      %v732 = vmul.f32 %v541, %v541
      %v733 = vsel %vm400, %v732, 0.0
      %734 = vadd.xlane.f32.xlu0 %v733
      %v735 = vpop.xlane.xlu0 %734
      %v736 = vrot.slane %v735, 4
      %v737 = vadd.f32 %v735, %v736
      %v738 = vrot.slane %v737, 2
      %v739 = vadd.f32 %v737, %v738
      %v740 = vrot.slane %v739, 1
      %v741 = vadd.f32 %v739, %v740
      %s742 = vtos %v741
      %v743 = vstv %s742
      %v744 = vrsqrt.pop %v743
      %s745 = vtos %v744
      %v746 = vlaneseq
      %v747 = vshrl.u32 %v746, 7
      %v748 = vsub.s32 0, %v747
      %v749 = vrot.slane %v541, %v748
      %v750 = vmul.f32 %v730, %v749
      %v751 = vmul.f32 %v731, %v749
      %v752 = vsel %vm420, %v750, 0.0
      %753 = vadd.xlane.f32.xlu0 %v752
      %v754 = vpop.xlane.xlu0 %753
      %v755 = vsel %vm420, %v751, 0.0
      %756 = vadd.xlane.f32.xlu0 %v755
      %v757 = vpop.xlane.xlu0 %756
      %v758 = vstv %s745
      %v759 = vmul.f32 %v754, %v758
      %v760 = vmul.f32 %v757, %v758
      %v761 = vsel %vm507, %v759, -1e+30
      %v762 = vsel %vm508, %v760, -1e+30
      %v763 = vmul.f32 %v761, %v202
      %v764 = vmul.f32 %v762, %v203
      %v765 = vsel %vm209, %v763, 0.0
      %v766 = vsel %vm209, %v764, 0.0
      %v767 = vadd.f32 %v765, %v766
      %v768 = vrot.slane %v767, 4
      %v769 = vadd.f32 %v767, %v768
      %v770 = vrot.slane %v769, 2
      %v771 = vadd.f32 %v769, %v770
      %v772 = vrot.slane %v771, 1
      %v773 = vadd.f32 %v771, %v772
      %vm774 = vcmp.gt.f32.partialorder %v761, %v773
      %vm775 = vcmp.gt.f32.partialorder %v762, %v773
      %vm776 = vcmp.eq.f32.partialorder %v761, %v773
      %vm777 = vcmp.eq.f32.partialorder %v762, %v773
      %vm778 = vmand %vm776, %vm448
      %vm779 = vmand %vm777, %vm449
      %vm780 = vmor %vm774, %vm778
      %vm781 = vmor %vm775, %vm779
      %vm782 = vmand %vm196, %vm780
      %vm783 = vmand %vm197, %vm781
      %vm784 = vcmp.gt.f32.partialorder %v773, %v761
      %vm785 = vcmp.gt.f32.partialorder %v773, %v762
      %vm786 = vcmp.eq.f32.partialorder %v773, %v761
      %vm787 = vcmp.eq.f32.partialorder %v773, %v762
      %vm788 = vmand %vm786, %vm460
      %vm789 = vmand %vm787, %vm461
      %vm790 = vmor %vm784, %vm788
      %vm791 = vmor %vm785, %vm789
      %vm792 = vmand %vm196, %vm790
      %vm793 = vmand %vm197, %vm791
      %v794 = vsel %vm792, 1, 0
      %v795 = vsel %vm793, 1, 0
      %v796 = vcvt.s32.f32 %v794
      %v797 = vcvt.s32.f32 %v795
      %v798 = vsel %vm209, %v796, 0.0
      %799 = vadd.xlane.f32.xlu0 %v798
      %v800 = vpop.xlane.xlu0 %799
      %v801 = vsel %vm209, %v797, 0.0
      %802 = vadd.xlane.f32.xlu0 %v801
      %v803 = vpop.xlane.xlu0 %802
      %v804 = vsel %vm782, 1, 0
      %v805 = vsel %vm783, 1, 0
      %v806 = vcvt.s32.f32 %v804
      %v807 = vcvt.s32.f32 %v805
      %v808 = vsel %vm209, %v806, 0.0
      %v809 = vsel %vm209, %v807, 0.0
      %v810 = vadd.f32 %v808, %v809
      %v811 = vrot.slane %v810, 4
      %v812 = vadd.f32 %v810, %v811
      %v813 = vrot.slane %v812, 2
      %v814 = vadd.f32 %v812, %v813
      %v815 = vrot.slane %v814, 1
      %v816 = vadd.f32 %v814, %v815
      %vm817 = vcmp.lt.f32.partialorder %v800, 4.0
      %vm818 = vcmp.lt.f32.partialorder %v803, 4.0
      %v819 = vsel %vm817, 1.0, 0.0
      %v820 = vsel %vm818, 1.0, 0.0
      %v821 = vmul.f32 %v819, %v493
      %v822 = vmul.f32 %v820, %v494
      %vm823 = vcmp.lt.f32.partialorder %v816, 4.0
      %v824 = vsel %vm823, 1.0, 0.0
      %v825 = vmul.f32 %v824, %v496
      %v826 = vtanh.pop %v759
      %v827 = vtanh.pop %v760
      %v828 = vmul.f32 %v730, %v826
      %v829 = vmul.f32 %v731, %v827
      %v830 = vmul.f32 %v828, %v821
      %v831 = vmul.f32 %v829, %v822
      %v832 = vmul.f32 %v505, %v821
      %v833 = vmul.f32 %v506, %v822
      %v834 = vmul.f32 %v832, %v825
      %v835 = vmul.f32 %v833, %v825
      %vm836 = vcmp.gt.f32.partialorder %v821, 0.5
      %vm837 = vcmp.gt.f32.partialorder %v822, 0.5
      %v838 = vsel %vm836, 1, 0
      %v839 = vsel %vm837, 1, 0
      %vm840 = vcmp.eq.s32.totalorder %v838, 1
      %vm841 = vcmp.eq.s32.totalorder %v839, 1
      %v842 = vsel %vm840, %v830, -1e+30
      %v843 = vsel %vm841, %v831, -1e+30
      %v844 = vsel %vm420, %v842, -inf
      %v845 = vsel %vm420, %v843, -inf
      %v846 = vmax.f32 %v844, %v845
      %v847 = vrot.slane %v846, 4
      %v848 = vmax.f32 %v846, %v847
      %v849 = vrot.slane %v848, 2
      %v850 = vmax.f32 %v848, %v849
      %v851 = vrot.slane %v850, 1
      %v852 = vmax.f32 %v850, %v851
      %v853 = vadd.f32 %v524, %v852
      %v854 = vsel %vm420, %v830, 0.0
      %v855 = vsel %vm420, %v831, 0.0
      %v856 = vadd.f32 %v854, %v855
      %v857 = vrot.slane %v856, 4
      %v858 = vadd.f32 %v856, %v857
      %v859 = vrot.slane %v858, 2
      %v860 = vadd.f32 %v858, %v859
      %v861 = vrot.slane %v860, 1
      %v862 = vadd.f32 %v860, %v861
      %v863 = vmul.f32 %v862, 0.25
      %v864 = vadd.f32 %v535, %v863
      %v865 = vld [vmem:[%s2 + $0x28] sm:$0xff]
      %v866 = vld [vmem:[%s2 + $0x30] sm:$0xff]
      %v867 = vld [vmem:[%s2 + $0x38] sm:$0xff]
      %v868 = vld [vmem:[%s2 + $0x40] sm:$0xff]
      %v869 = vld [vmem:[%s2 + $0xba] sm:$0x1]
      %v870 = vld [vmem:[%s2 + $0xbd] sm:$0x1]
      %v871 = vadd.f32 %v834, %v202
      %v872 = vadd.f32 %v835, %v203
      %v873 = vsel %vm209, %v871, 0.0
      %874 = vadd.xlane.f32.xlu0 %v873
      %v875 = vpop.xlane.xlu0 %874
      %v876 = vsel %vm209, %v872, 0.0
      %877 = vadd.xlane.f32.xlu0 %v876
      %v878 = vpop.xlane.xlu0 %877
      %v879 = vrsqrt.pop %v875
      %v880 = vrsqrt.pop %v878
      %v881 = vadd.f32 %v873, %v876
      %v882 = vrot.slane %v881, 4
      %v883 = vadd.f32 %v881, %v882
      %v884 = vrot.slane %v883, 2
      %v885 = vadd.f32 %v883, %v884
      %v886 = vrot.slane %v885, 1
      %v887 = vadd.f32 %v885, %v886
      %v888 = vrsqrt.pop %v887
      %v889 = vmul.f32 %v871, %v879
      %v890 = vmul.f32 %v872, %v880
      %v891 = vmul.f32 %v889, %v888
      %v892 = vmul.f32 %v890, %v888
      %v894 = vsel %vm420, %v830, 0
      %v897 = vsel %vm420, %v831, 0
      %899 = vmatprep.subr.mxu0 0.0
      %900 = vmatpush1.msra.mxu0 0.0
      %901 = vmatprep.subr.mxu0 0.0
      %902 = vmatpush1.msra.mxu0 0.0
      %903 = vmatprep.subr.mxu0 0.0
      %904 = vmatpush1.msra.mxu0 0.0
      %905 = vmatprep.subr.mxu0 0.0
      %906 = vmatpush1.msra.mxu0 0.0
      %907 = vmatprep.subr.mxu0 0.0
      %908 = vmatpush1.msra.mxu0 0.0
      %909 = vmatprep.subr.mxu0 0.0
      %910 = vmatpush1.msra.mxu0 0.0
      %911 = vmatprep.subr.mxu0 0.0
      %912 = vmatpush1.msra.mxu0 0.0
      %913 = vmatprep.subr.mxu0 0.0
      %914 = vmatpush1.msra.mxu0 0.0
      %915 = vmatprep.subr.mxu0 0.0
      %916 = vmatpush1.msra.mxu0 0.0
      %917 = vmatprep.subr.mxu0 0.0
      %918 = vmatpush1.msra.mxu0 0.0
      %919 = vmatprep.subr.mxu0 0.0
      %920 = vmatpush1.msra.mxu0 0.0
      %921 = vmatprep.subr.mxu0 0.0
      %922 = vmatpush1.msra.mxu0 0.0
      %923 = vmatprep.subr.mxu0 0.0
      %924 = vmatpush1.msra.mxu0 %v868
      %925 = vmatprep.subr.mxu0 0.0
      %926 = vmatpush1.msra.mxu0 %v867
      %927 = vmatprep.subr.mxu0 0.0
      %928 = vmatpush1.msra.mxu0 %v866
      %929 = vmatprep.subr.mxu0 0.0
      %930 = vmatpush1.msra.mxu0 %v865
      %931 = vmatprep.subr.mxu0 0.0
      %932 = vmatpush2.msra.mxu0 0.0
      %933 = vmatprep.subr.mxu0 0.0
      %934 = vmatpush2.msra.mxu0 0.0
      %935 = vmatprep.subr.mxu0 0.0
      %936 = vmatpush2.msra.mxu0 0.0
      %937 = vmatprep.subr.mxu0 0.0
      %938 = vmatpush2.msra.mxu0 0.0
      %939 = vmatprep.subr.mxu0 0.0
      %940 = vmatpush2.msra.mxu0 0.0
      %941 = vmatprep.subr.mxu0 0.0
      %942 = vmatpush2.msra.mxu0 0.0
      %943 = vmatprep.subr.mxu0 0.0
      %944 = vmatpush2.msra.mxu0 0.0
      %945 = vmatprep.subr.mxu0 0.0
      %946 = vmatpush2.msra.mxu0 0.0
      %947 = vmatprep.subr.mxu0 0.0
      %948 = vmatpush2.msra.mxu0 0.0
      %949 = vmatprep.subr.mxu0 0.0
      %950 = vmatpush2.msra.mxu0 0.0
      %951 = vmatprep.subr.mxu0 0.0
      %952 = vmatpush2.msra.mxu0 0.0
      %953 = vmatprep.subr.mxu0 0.0
      %954 = vmatpush2.msra.mxu0 0.0
      %955 = vmatprep.subr.mxu0 0.0
      %956 = vmatpush2.msra.mxu0 0.0
      %957 = vmatprep.subr.mxu0 0.0
      %958 = vmatpush2.msra.mxu0 0.0
      %959 = vmatprep.subr.mxu0 0.0
      %960 = vmatpush2.msra.mxu0 0.0
      %961 = vmatprep.subr.mxu0 0.0
      %962 = vmatpush2.msra.mxu0 0.0
      %963 = vmatprep.mubr.f32.mxu0 0.0
      %964 = vmatmul.mubr.f32.gmra.mxu0 %v894
      %v965 = vpop.f32.mrf.mxu0
      %v966 = vadd.f32 0.0, %v965
      %v967 = vpop.f32.mrf.mxu0
      %968 = vmatprep.mubr.f32.mxu0 0.0
      %969 = vmatmul.mubr.f32.gmra.mxu0 %v897
      %v970 = vpop.f32.mrf.mxu0
      %v971 = vadd.f32 0.0, %v970
      %v972 = vpop.f32.mrf.mxu0
      %973 = vdwg.mxu0
      %v974 = vlaneseq
      %v975 = vshrl.u32 %v974, 7
      %v976 = vsub.s32 0, %v975
      %v977 = vrot.slane %v869, %v976
      %v979 = vsel %vm209, %v891, 0
      %v982 = vsel %vm209, %v892, 0
      %984 = vmatprep.subr.mxu0 0.0
      %985 = vmatpush1.msra.mxu0 0.0
      %986 = vmatprep.subr.mxu0 0.0
      %987 = vmatpush1.msra.mxu0 0.0
      %988 = vmatprep.subr.mxu0 0.0
      %989 = vmatpush1.msra.mxu0 0.0
      %990 = vmatprep.subr.mxu0 0.0
      %991 = vmatpush1.msra.mxu0 0.0
      %992 = vmatprep.subr.mxu0 0.0
      %993 = vmatpush1.msra.mxu0 0.0
      %994 = vmatprep.subr.mxu0 0.0
      %995 = vmatpush1.msra.mxu0 0.0
      %996 = vmatprep.subr.mxu0 0.0
      %997 = vmatpush1.msra.mxu0 0.0
      %998 = vmatprep.subr.mxu0 0.0
      %999 = vmatpush1.msra.mxu0 0.0
      %1000 = vmatprep.subr.mxu0 0.0
      %1001 = vmatpush1.msra.mxu0 0.0
      %1002 = vmatprep.subr.mxu0 0.0
      %1003 = vmatpush1.msra.mxu0 0.0
      %1004 = vmatprep.subr.mxu0 0.0
      %1005 = vmatpush1.msra.mxu0 0.0
      %1006 = vmatprep.subr.mxu0 0.0
      %1007 = vmatpush1.msra.mxu0 0.0
      %1008 = vmatprep.subr.mxu0 0.0
      %1009 = vmatpush1.msra.mxu0 0.0
      %1010 = vmatprep.subr.mxu0 0.0
      %1011 = vmatpush1.msra.mxu0 0.0
      %1012 = vmatprep.subr.mxu0 0.0
      %1013 = vmatpush1.msra.mxu0 %v971
      %1014 = vmatprep.subr.mxu0 0.0
      %1015 = vmatpush1.msra.mxu0 %v966
      %1016 = vmatprep.subr.mxu0 0.0
      %1017 = vmatpush2.msra.mxu0 0.0
      %1018 = vmatprep.subr.mxu0 0.0
      %1019 = vmatpush2.msra.mxu0 0.0
      %1020 = vmatprep.subr.mxu0 0.0
      %1021 = vmatpush2.msra.mxu0 0.0
      %1022 = vmatprep.subr.mxu0 0.0
      %1023 = vmatpush2.msra.mxu0 0.0
      %1024 = vmatprep.subr.mxu0 0.0
      %1025 = vmatpush2.msra.mxu0 0.0
      %1026 = vmatprep.subr.mxu0 0.0
      %1027 = vmatpush2.msra.mxu0 0.0
      %1028 = vmatprep.subr.mxu0 0.0
      %1029 = vmatpush2.msra.mxu0 0.0
      %1030 = vmatprep.subr.mxu0 0.0
      %1031 = vmatpush2.msra.mxu0 0.0
      %1032 = vmatprep.subr.mxu0 0.0
      %1033 = vmatpush2.msra.mxu0 0.0
      %1034 = vmatprep.subr.mxu0 0.0
      %1035 = vmatpush2.msra.mxu0 0.0
      %1036 = vmatprep.subr.mxu0 0.0
      %1037 = vmatpush2.msra.mxu0 0.0
      %1038 = vmatprep.subr.mxu0 0.0
      %1039 = vmatpush2.msra.mxu0 0.0
      %1040 = vmatprep.subr.mxu0 0.0
      %1041 = vmatpush2.msra.mxu0 0.0
      %1042 = vmatprep.subr.mxu0 0.0
      %1043 = vmatpush2.msra.mxu0 0.0
      %1044 = vmatprep.subr.mxu0 0.0
      %1045 = vmatpush2.msra.mxu0 0.0
      %1046 = vmatprep.subr.mxu0 0.0
      %1047 = vmatpush2.msra.mxu0 0.0
      %1048 = vmatprep.mubr.f32.mxu0 0.0
      %1049 = vmatmul.mubr.f32.gmra.mxu0 %v979
      %v1050 = vpop.f32.mrf.mxu0
      %v1051 = vadd.f32 %v977, %v1050
      %v1052 = vpop.f32.mrf.mxu0
      %1053 = vmatprep.mubr.f32.mxu0 0.0
      %1054 = vmatmul.mubr.f32.gmra.mxu0 %v982
      %v1055 = vpop.f32.mrf.mxu0
      %v1056 = vadd.f32 %v977, %v1055
      %v1057 = vpop.f32.mrf.mxu0
      %1058 = vdwg.mxu0
      %v1059 = vmax.f32 %v1051, 0.0
      %v1060 = vmax.f32 %v1056, 0.0
      %v1061 = vmul.f32 %v870, %v870
      %v1062 = vsel %vm400, %v1061, 0.0
      %1063 = vadd.xlane.f32.xlu0 %v1062
      %v1064 = vpop.xlane.xlu0 %1063
      %v1065 = vrot.slane %v1064, 4
      %v1066 = vadd.f32 %v1064, %v1065
      %v1067 = vrot.slane %v1066, 2
      %v1068 = vadd.f32 %v1066, %v1067
      %v1069 = vrot.slane %v1068, 1
      %v1070 = vadd.f32 %v1068, %v1069
      %s1071 = vtos %v1070
      %v1072 = vstv %s1071
      %v1073 = vrsqrt.pop %v1072
      %s1074 = vtos %v1073
      %v1075 = vlaneseq
      %v1076 = vshrl.u32 %v1075, 7
      %v1077 = vsub.s32 0, %v1076
      %v1078 = vrot.slane %v870, %v1077
      %v1079 = vmul.f32 %v1059, %v1078
      %v1080 = vmul.f32 %v1060, %v1078
      %v1081 = vsel %vm420, %v1079, 0.0
      %1082 = vadd.xlane.f32.xlu0 %v1081
      %v1083 = vpop.xlane.xlu0 %1082
      %v1084 = vsel %vm420, %v1080, 0.0
      %1085 = vadd.xlane.f32.xlu0 %v1084
      %v1086 = vpop.xlane.xlu0 %1085
      %v1087 = vstv %s1074
      %v1088 = vmul.f32 %v1083, %v1087
      %v1089 = vmul.f32 %v1086, %v1087
      %v1090 = vsel %vm836, %v1088, -1e+30
      %v1091 = vsel %vm837, %v1089, -1e+30
      %v1092 = vmul.f32 %v1090, %v202
      %v1093 = vmul.f32 %v1091, %v203
      %v1094 = vsel %vm209, %v1092, 0.0
      %v1095 = vsel %vm209, %v1093, 0.0
      %v1096 = vadd.f32 %v1094, %v1095
      %v1097 = vrot.slane %v1096, 4
      %v1098 = vadd.f32 %v1096, %v1097
      %v1099 = vrot.slane %v1098, 2
      %v1100 = vadd.f32 %v1098, %v1099
      %v1101 = vrot.slane %v1100, 1
      %v1102 = vadd.f32 %v1100, %v1101
      %vm1103 = vcmp.gt.f32.partialorder %v1102, %v1090
      %vm1104 = vcmp.gt.f32.partialorder %v1102, %v1091
      %vm1105 = vcmp.eq.f32.partialorder %v1102, %v1090
      %vm1106 = vcmp.eq.f32.partialorder %v1102, %v1091
      %vm1107 = vmand %vm1105, %vm460
      %vm1108 = vmand %vm1106, %vm461
      %vm1109 = vmor %vm1103, %vm1107
      %vm1110 = vmor %vm1104, %vm1108
      %vm1111 = vmand %vm196, %vm1109
      %vm1112 = vmand %vm197, %vm1110
      %v1113 = vsel %vm1111, 1, 0
      %v1114 = vsel %vm1112, 1, 0
      %v1115 = vcvt.s32.f32 %v1113
      %v1116 = vcvt.s32.f32 %v1114
      %v1117 = vsel %vm209, %v1115, 0.0
      %1118 = vadd.xlane.f32.xlu0 %v1117
      %v1119 = vpop.xlane.xlu0 %1118
      %v1120 = vsel %vm209, %v1116, 0.0
      %1121 = vadd.xlane.f32.xlu0 %v1120
      %v1122 = vpop.xlane.xlu0 %1121
      %vm1123 = vcmp.lt.f32.partialorder %v1119, 2.0
      %vm1124 = vcmp.lt.f32.partialorder %v1122, 2.0
      %v1125 = vsel %vm1123, 1.0, 0.0
      %v1126 = vsel %vm1124, 1.0, 0.0
      %v1127 = vmul.f32 %v1125, %v821
      %v1128 = vmul.f32 %v1126, %v822
      %v1129 = vtanh.pop %v1088
      %v1130 = vtanh.pop %v1089
      %v1131 = vmul.f32 %v1059, %v1129
      %v1132 = vmul.f32 %v1060, %v1130
      %v1133 = vmul.f32 %v1131, %v1127
      %v1134 = vmul.f32 %v1132, %v1128
      %vm1135 = vcmp.gt.f32.partialorder %v1127, 0.5
      %vm1136 = vcmp.gt.f32.partialorder %v1128, 0.5
      %v1137 = vsel %vm1135, 1, 0
      %v1138 = vsel %vm1136, 1, 0
      %vm1139 = vcmp.eq.s32.totalorder %v1137, 1
      %vm1140 = vcmp.eq.s32.totalorder %v1138, 1
      %v1141 = vsel %vm1139, %v1133, -1e+30
      %v1142 = vsel %vm1140, %v1134, -1e+30
      %v1143 = vsel %vm420, %v1141, -inf
      %v1144 = vsel %vm420, %v1142, -inf
      %v1145 = vmax.f32 %v1143, %v1144
      %v1146 = vrot.slane %v1145, 4
      %v1147 = vmax.f32 %v1145, %v1146
      %v1148 = vrot.slane %v1147, 2
      %v1149 = vmax.f32 %v1147, %v1148
      %v1150 = vrot.slane %v1149, 1
      %v1151 = vmax.f32 %v1149, %v1150
      %v1152 = vadd.f32 %v853, %v1151
      %v1153 = vsel %vm420, %v1133, 0.0
      %v1154 = vsel %vm420, %v1134, 0.0
      %v1155 = vadd.f32 %v1153, %v1154
      %v1156 = vrot.slane %v1155, 4
      %v1157 = vadd.f32 %v1155, %v1156
      %v1158 = vrot.slane %v1157, 2
      %v1159 = vadd.f32 %v1157, %v1158
      %v1160 = vrot.slane %v1159, 1
      %v1161 = vadd.f32 %v1159, %v1160
      %v1162 = vmul.f32 %v1161, 0.5
      %v1163 = vadd.f32 %v864, %v1162
      %v1164 = vld [vmem:[%s2 + $0x48] sm:$0xff]
      %v1165 = vld [vmem:[%s2 + $0x50] sm:$0xff]
      %v1166 = vld [vmem:[%s2 + $0x58] sm:$0xff]
      %v1167 = vld [vmem:[%s2 + $0x60] sm:$0xff]
      %v1168 = vld [vmem:[%s2 + $0x68] sm:$0xff]
      %v1169 = vld [vmem:[%s2 + $0x70] sm:$0xff]
      %v1170 = vld [vmem:[%s2 + $0x78] sm:$0xff]
      %v1171 = vld [vmem:[%s2 + $0x80] sm:$0xff]
      %v1173 = vsel %vm420, %v1163, 0
      %1175 = vmatprep.subr.mxu0 0.0
      %1176 = vmatpush1.msra.mxu0 0.0
      %1177 = vmatprep.subr.mxu0 0.0
      %1178 = vmatpush1.msra.mxu0 0.0
      %1179 = vmatprep.subr.mxu0 0.0
      %1180 = vmatpush1.msra.mxu0 0.0
      %1181 = vmatprep.subr.mxu0 0.0
      %1182 = vmatpush1.msra.mxu0 0.0
      %1183 = vmatprep.subr.mxu0 0.0
      %1184 = vmatpush1.msra.mxu0 0.0
      %1185 = vmatprep.subr.mxu0 0.0
      %1186 = vmatpush1.msra.mxu0 0.0
      %1187 = vmatprep.subr.mxu0 0.0
      %1188 = vmatpush1.msra.mxu0 0.0
      %1189 = vmatprep.subr.mxu0 0.0
      %1190 = vmatpush1.msra.mxu0 0.0
      %1191 = vmatprep.subr.mxu0 0.0
      %1192 = vmatpush1.msra.mxu0 0.0
      %1193 = vmatprep.subr.mxu0 0.0
      %1194 = vmatpush1.msra.mxu0 0.0
      %1195 = vmatprep.subr.mxu0 0.0
      %1196 = vmatpush1.msra.mxu0 0.0
      %1197 = vmatprep.subr.mxu0 0.0
      %1198 = vmatpush1.msra.mxu0 0.0
      %1199 = vmatprep.subr.mxu0 0.0
      %1200 = vmatpush1.msra.mxu0 %v1171
      %1201 = vmatprep.subr.mxu0 0.0
      %1202 = vmatpush1.msra.mxu0 %v1170
      %1203 = vmatprep.subr.mxu0 0.0
      %1204 = vmatpush1.msra.mxu0 %v1169
      %1205 = vmatprep.subr.mxu0 0.0
      %1206 = vmatpush1.msra.mxu0 %v1168
      %1207 = vmatprep.subr.mxu0 0.0
      %1208 = vmatpush2.msra.mxu0 0.0
      %1209 = vmatprep.subr.mxu0 0.0
      %1210 = vmatpush2.msra.mxu0 0.0
      %1211 = vmatprep.subr.mxu0 0.0
      %1212 = vmatpush2.msra.mxu0 0.0
      %1213 = vmatprep.subr.mxu0 0.0
      %1214 = vmatpush2.msra.mxu0 0.0
      %1215 = vmatprep.subr.mxu0 0.0
      %1216 = vmatpush2.msra.mxu0 0.0
      %1217 = vmatprep.subr.mxu0 0.0
      %1218 = vmatpush2.msra.mxu0 0.0
      %1219 = vmatprep.subr.mxu0 0.0
      %1220 = vmatpush2.msra.mxu0 0.0
      %1221 = vmatprep.subr.mxu0 0.0
      %1222 = vmatpush2.msra.mxu0 0.0
      %1223 = vmatprep.subr.mxu0 0.0
      %1224 = vmatpush2.msra.mxu0 0.0
      %1225 = vmatprep.subr.mxu0 0.0
      %1226 = vmatpush2.msra.mxu0 0.0
      %1227 = vmatprep.subr.mxu0 0.0
      %1228 = vmatpush2.msra.mxu0 0.0
      %1229 = vmatprep.subr.mxu0 0.0
      %1230 = vmatpush2.msra.mxu0 0.0
      %1231 = vmatprep.subr.mxu0 0.0
      %1232 = vmatpush2.msra.mxu0 0.0
      %1233 = vmatprep.subr.mxu0 0.0
      %1234 = vmatpush2.msra.mxu0 0.0
      %1235 = vmatprep.subr.mxu0 0.0
      %1236 = vmatpush2.msra.mxu0 0.0
      %1237 = vmatprep.subr.mxu0 0.0
      %1238 = vmatpush2.msra.mxu0 0.0
      %1239 = vmatprep.mubr.f32.mxu0 0.0
      %1240 = vmatmul.mubr.f32.gmra.mxu0 %v1173
      %v1241 = vpop.f32.mrf.mxu0
      %v1242 = vadd.f32 0.0, %v1241
      %v1243 = vpop.f32.mrf.mxu0
      %1244 = vdwg.mxu0
      %v1246 = vsel %vm420, %v1152, 0
      %1248 = vmatprep.subr.mxu0 0.0
      %1249 = vmatpush1.msra.mxu0 0.0
      %1250 = vmatprep.subr.mxu0 0.0
      %1251 = vmatpush1.msra.mxu0 0.0
      %1252 = vmatprep.subr.mxu0 0.0
      %1253 = vmatpush1.msra.mxu0 0.0
      %1254 = vmatprep.subr.mxu0 0.0
      %1255 = vmatpush1.msra.mxu0 0.0
      %1256 = vmatprep.subr.mxu0 0.0
      %1257 = vmatpush1.msra.mxu0 0.0
      %1258 = vmatprep.subr.mxu0 0.0
      %1259 = vmatpush1.msra.mxu0 0.0
      %1260 = vmatprep.subr.mxu0 0.0
      %1261 = vmatpush1.msra.mxu0 0.0
      %1262 = vmatprep.subr.mxu0 0.0
      %1263 = vmatpush1.msra.mxu0 0.0
      %1264 = vmatprep.subr.mxu0 0.0
      %1265 = vmatpush1.msra.mxu0 0.0
      %1266 = vmatprep.subr.mxu0 0.0
      %1267 = vmatpush1.msra.mxu0 0.0
      %1268 = vmatprep.subr.mxu0 0.0
      %1269 = vmatpush1.msra.mxu0 0.0
      %1270 = vmatprep.subr.mxu0 0.0
      %1271 = vmatpush1.msra.mxu0 0.0
      %1272 = vmatprep.subr.mxu0 0.0
      %1273 = vmatpush1.msra.mxu0 %v1167
      %1274 = vmatprep.subr.mxu0 0.0
      %1275 = vmatpush1.msra.mxu0 %v1166
      %1276 = vmatprep.subr.mxu0 0.0
      %1277 = vmatpush1.msra.mxu0 %v1165
      %1278 = vmatprep.subr.mxu0 0.0
      %1279 = vmatpush1.msra.mxu0 %v1164
      %1280 = vmatprep.subr.mxu0 0.0
      %1281 = vmatpush2.msra.mxu0 0.0
      %1282 = vmatprep.subr.mxu0 0.0
      %1283 = vmatpush2.msra.mxu0 0.0
      %1284 = vmatprep.subr.mxu0 0.0
      %1285 = vmatpush2.msra.mxu0 0.0
      %1286 = vmatprep.subr.mxu0 0.0
      %1287 = vmatpush2.msra.mxu0 0.0
      %1288 = vmatprep.subr.mxu0 0.0
      %1289 = vmatpush2.msra.mxu0 0.0
      %1290 = vmatprep.subr.mxu0 0.0
      %1291 = vmatpush2.msra.mxu0 0.0
      %1292 = vmatprep.subr.mxu0 0.0
      %1293 = vmatpush2.msra.mxu0 0.0
      %1294 = vmatprep.subr.mxu0 0.0
      %1295 = vmatpush2.msra.mxu0 0.0
      %1296 = vmatprep.subr.mxu0 0.0
      %1297 = vmatpush2.msra.mxu0 0.0
      %1298 = vmatprep.subr.mxu0 0.0
      %1299 = vmatpush2.msra.mxu0 0.0
      %1300 = vmatprep.subr.mxu0 0.0
      %1301 = vmatpush2.msra.mxu0 0.0
      %1302 = vmatprep.subr.mxu0 0.0
      %1303 = vmatpush2.msra.mxu0 0.0
      %1304 = vmatprep.subr.mxu0 0.0
      %1305 = vmatpush2.msra.mxu0 0.0
      %1306 = vmatprep.subr.mxu0 0.0
      %1307 = vmatpush2.msra.mxu0 0.0
      %1308 = vmatprep.subr.mxu0 0.0
      %1309 = vmatpush2.msra.mxu0 0.0
      %1310 = vmatprep.subr.mxu0 0.0
      %1311 = vmatpush2.msra.mxu0 0.0
      %1312 = vmatprep.mubr.f32.mxu0 0.0
      %1313 = vmatmul.mubr.f32.gmra.mxu0 %v1246
      %v1314 = vpop.f32.mrf.mxu0
      %v1315 = vadd.f32 %v1242, %v1314
      %v1316 = vpop.f32.mrf.mxu0
      %1317 = vdwg.mxu0
      %v1318 = vld [vmem:[%s2 + $0xbe] sm:$0x1]
      %v1319 = vadd.f32 %v1315, %v1318
      %v1320 = vmax.f32 %v1319, 0.0
      %v1321 = vld [vmem:[%s2 + $0x88] sm:$0xff]
      %v1322 = vld [vmem:[%s2 + $0x90] sm:$0xff]
      %v1323 = vld [vmem:[%s2 + $0x98] sm:$0xff]
      %v1324 = vld [vmem:[%s2 + $0xa0] sm:$0xff]
      %v1325 = vld [vmem:[%s2 + $0xbf] sm:$0x1]
      %v1327 = vsel %vm420, %v1320, 0
      %1329 = vmatprep.subr.mxu0 0.0
      %1330 = vmatpush1.msra.mxu0 0.0
      %1331 = vmatprep.subr.mxu0 0.0
      %1332 = vmatpush1.msra.mxu0 0.0
      %1333 = vmatprep.subr.mxu0 0.0
      %1334 = vmatpush1.msra.mxu0 0.0
      %1335 = vmatprep.subr.mxu0 0.0
      %1336 = vmatpush1.msra.mxu0 0.0
      %1337 = vmatprep.subr.mxu0 0.0
      %1338 = vmatpush1.msra.mxu0 0.0
      %1339 = vmatprep.subr.mxu0 0.0
      %1340 = vmatpush1.msra.mxu0 0.0
      %1341 = vmatprep.subr.mxu0 0.0
      %1342 = vmatpush1.msra.mxu0 0.0
      %1343 = vmatprep.subr.mxu0 0.0
      %1344 = vmatpush1.msra.mxu0 0.0
      %1345 = vmatprep.subr.mxu0 0.0
      %1346 = vmatpush1.msra.mxu0 0.0
      %1347 = vmatprep.subr.mxu0 0.0
      %1348 = vmatpush1.msra.mxu0 0.0
      %1349 = vmatprep.subr.mxu0 0.0
      %1350 = vmatpush1.msra.mxu0 0.0
      %1351 = vmatprep.subr.mxu0 0.0
      %1352 = vmatpush1.msra.mxu0 0.0
      %1353 = vmatprep.subr.mxu0 0.0
      %1354 = vmatpush1.msra.mxu0 %v1324
      %1355 = vmatprep.subr.mxu0 0.0
      %1356 = vmatpush1.msra.mxu0 %v1323
      %1357 = vmatprep.subr.mxu0 0.0
      %1358 = vmatpush1.msra.mxu0 %v1322
      %1359 = vmatprep.subr.mxu0 0.0
      %1360 = vmatpush1.msra.mxu0 %v1321
      %1361 = vmatprep.subr.mxu0 0.0
      %1362 = vmatpush2.msra.mxu0 0.0
      %1363 = vmatprep.subr.mxu0 0.0
      %1364 = vmatpush2.msra.mxu0 0.0
      %1365 = vmatprep.subr.mxu0 0.0
      %1366 = vmatpush2.msra.mxu0 0.0
      %1367 = vmatprep.subr.mxu0 0.0
      %1368 = vmatpush2.msra.mxu0 0.0
      %1369 = vmatprep.subr.mxu0 0.0
      %1370 = vmatpush2.msra.mxu0 0.0
      %1371 = vmatprep.subr.mxu0 0.0
      %1372 = vmatpush2.msra.mxu0 0.0
      %1373 = vmatprep.subr.mxu0 0.0
      %1374 = vmatpush2.msra.mxu0 0.0
      %1375 = vmatprep.subr.mxu0 0.0
      %1376 = vmatpush2.msra.mxu0 0.0
      %1377 = vmatprep.subr.mxu0 0.0
      %1378 = vmatpush2.msra.mxu0 0.0
      %1379 = vmatprep.subr.mxu0 0.0
      %1380 = vmatpush2.msra.mxu0 0.0
      %1381 = vmatprep.subr.mxu0 0.0
      %1382 = vmatpush2.msra.mxu0 0.0
      %1383 = vmatprep.subr.mxu0 0.0
      %1384 = vmatpush2.msra.mxu0 0.0
      %1385 = vmatprep.subr.mxu0 0.0
      %1386 = vmatpush2.msra.mxu0 0.0
      %1387 = vmatprep.subr.mxu0 0.0
      %1388 = vmatpush2.msra.mxu0 0.0
      %1389 = vmatprep.subr.mxu0 0.0
      %1390 = vmatpush2.msra.mxu0 0.0
      %1391 = vmatprep.subr.mxu0 0.0
      %1392 = vmatpush2.msra.mxu0 0.0
      %1393 = vmatprep.mubr.f32.mxu0 0.0
      %1394 = vmatmul.mubr.f32.gmra.mxu0 %v1327
      %v1395 = vpop.f32.mrf.mxu0
      %v1396 = vadd.f32 %v1325, %v1395
      %v1397 = vpop.f32.mrf.mxu0
      %1398 = vdwg.mxu0
      %v1399 = vmax.f32 %v1396, 0.0
      %v1400 = vld [vmem:[%s2 + $0xa8] sm:$0xff]
      %v1401 = vld [vmem:[%s2 + $0xb0] sm:$0xff]
      %v1402 = vld [vmem:[%s2 + $0xc0] sm:$0x1]
      %v1404 = vsel %vm209, %v1399, 0
      %1406 = vmatprep.subr.mxu0 0.0
      %1407 = vmatpush1.msra.mxu0 0.0
      %1408 = vmatprep.subr.mxu0 0.0
      %1409 = vmatpush1.msra.mxu0 0.0
      %1410 = vmatprep.subr.mxu0 0.0
      %1411 = vmatpush1.msra.mxu0 0.0
      %1412 = vmatprep.subr.mxu0 0.0
      %1413 = vmatpush1.msra.mxu0 0.0
      %1414 = vmatprep.subr.mxu0 0.0
      %1415 = vmatpush1.msra.mxu0 0.0
      %1416 = vmatprep.subr.mxu0 0.0
      %1417 = vmatpush1.msra.mxu0 0.0
      %1418 = vmatprep.subr.mxu0 0.0
      %1419 = vmatpush1.msra.mxu0 0.0
      %1420 = vmatprep.subr.mxu0 0.0
      %1421 = vmatpush1.msra.mxu0 0.0
      %1422 = vmatprep.subr.mxu0 0.0
      %1423 = vmatpush1.msra.mxu0 0.0
      %1424 = vmatprep.subr.mxu0 0.0
      %1425 = vmatpush1.msra.mxu0 0.0
      %1426 = vmatprep.subr.mxu0 0.0
      %1427 = vmatpush1.msra.mxu0 0.0
      %1428 = vmatprep.subr.mxu0 0.0
      %1429 = vmatpush1.msra.mxu0 0.0
      %1430 = vmatprep.subr.mxu0 0.0
      %1431 = vmatpush1.msra.mxu0 0.0
      %1432 = vmatprep.subr.mxu0 0.0
      %1433 = vmatpush1.msra.mxu0 0.0
      %1434 = vmatprep.subr.mxu0 0.0
      %1435 = vmatpush1.msra.mxu0 %v1401
      %1436 = vmatprep.subr.mxu0 0.0
      %1437 = vmatpush1.msra.mxu0 %v1400
      %1438 = vmatprep.subr.mxu0 0.0
      %1439 = vmatpush2.msra.mxu0 0.0
      %1440 = vmatprep.subr.mxu0 0.0
      %1441 = vmatpush2.msra.mxu0 0.0
      %1442 = vmatprep.subr.mxu0 0.0
      %1443 = vmatpush2.msra.mxu0 0.0
      %1444 = vmatprep.subr.mxu0 0.0
      %1445 = vmatpush2.msra.mxu0 0.0
      %1446 = vmatprep.subr.mxu0 0.0
      %1447 = vmatpush2.msra.mxu0 0.0
      %1448 = vmatprep.subr.mxu0 0.0
      %1449 = vmatpush2.msra.mxu0 0.0
      %1450 = vmatprep.subr.mxu0 0.0
      %1451 = vmatpush2.msra.mxu0 0.0
      %1452 = vmatprep.subr.mxu0 0.0
      %1453 = vmatpush2.msra.mxu0 0.0
      %1454 = vmatprep.subr.mxu0 0.0
      %1455 = vmatpush2.msra.mxu0 0.0
      %1456 = vmatprep.subr.mxu0 0.0
      %1457 = vmatpush2.msra.mxu0 0.0
      %1458 = vmatprep.subr.mxu0 0.0
      %1459 = vmatpush2.msra.mxu0 0.0
      %1460 = vmatprep.subr.mxu0 0.0
      %1461 = vmatpush2.msra.mxu0 0.0
      %1462 = vmatprep.subr.mxu0 0.0
      %1463 = vmatpush2.msra.mxu0 0.0
      %1464 = vmatprep.subr.mxu0 0.0
      %1465 = vmatpush2.msra.mxu0 0.0
      %1466 = vmatprep.subr.mxu0 0.0
      %1467 = vmatpush2.msra.mxu0 0.0
      %1468 = vmatprep.subr.mxu0 0.0
      %1469 = vmatpush2.msra.mxu0 0.0
      %1470 = vmatprep.mubr.f32.mxu0 0.0
      %1471 = vmatmul.mubr.f32.gmra.mxu0 %v1404
      %v1472 = vpop.f32.mrf.mxu0
      %v1473 = vadd.f32 %v1402, %v1472
      %v1474 = vpop.f32.mrf.mxu0
      %1475 = vdwg.mxu0
      %vm1476 = vcmask 8192
      %v1477 = vsel %vm1476, %v1473, -inf
      %1478 = vmax.xlane.f32.xlu0 %v1477
      %v1479 = vpop.xlane.xlu0 %1478
      %v1480 = vsub.f32 %v1473, %v1479
      %v1481 = vmul.f32 %v1480, 1.442695
      %v1482 = vpow.pop %v1481
      %v1483 = vsel %vm1476, %v1482, 0.0
      %1484 = vadd.xlane.f32.xlu0 %v1483
      %v1485 = vpop.xlane.xlu0 %1484
      %v1486 = vlog2.pop %v1485
      %v1487 = vmul.f32 %v1486, 0.6931472
      %v1488 = vsub.f32 %v1480, %v1487
      %1489 = vst.msk [vmem:[%s186] sm:$0x1] %vm1476, %v1488
      %p1490 = scmp.lt.s32.totalorder %s14, 3
      %s1491 = scalar_select %p1490, %s14, 3
      %s1492 = scalar_lea.vmem %s3, %s1491
      // Predicated region
      $region33: #{net_forward.1} parent=31 // pred_check
        %p1493 = pneg %p105
      $region34: #{net_forward.1} parent=31 // pred_check_branch
        %1495 = sbr.rel (%p1493) target = $region36
      $region35: #{net_forward.1} parent=31 // pred_region
        _
      $region36: #{net_forward.1} parent=31 // pred_fallthru
        _
    $region32: #{net_forward.1} parent=5 // pred_fallthru
      _
    %p1496 = scmp.le.s32.totalorder 2, %s9
    // Predicated region
    $region37: #{net_forward.1} parent=5 // pred_check
      %p1497 = pneg %p1496
    $region38: #{net_forward.1} parent=5 // pred_check_branch
      %1499 = sbr.rel (%p1497) target = $region40
    $region39: #{net_forward.1} parent=5 // pred_region
      %s1500 = ssub.s32 %s9, 2
      // Predicated region
      $region41: #{net_forward.1} parent=39 // pred_check
        %p1501 = pneg %p111
      $region42: #{net_forward.1} parent=39 // pred_check_branch
        %1503 = sbr.rel (%p1501) target = $region44
      $region43: #{net_forward.1} parent=39 // pred_region
        %p1504 = scmp.lt.s32.totalorder %s15, 3
        %s1505 = scalar_select %p1504, %s15, 3
        %s1506 = scalar_lea.vmem %s3, %s1505
      $region44: #{net_forward.1} parent=39 // pred_fallthru
        _
    $region40: #{net_forward.1} parent=5 // pred_fallthru
      _
  $region6: #{net_forward.1} parent=0 // loop_footer
    %s13 = sadd.s32 1, %s9
  $region7: #{net_forward.1} parent=0 // loop_footer_branch
    %8 = sbr.rel target = $region3
  $region8: #{net_forward.1} parent=0 // loop_exit
    _

</llo_original>
